<compile_context>
chip_gen: v5e
topology: v5e:2x2
jax: 0.10.0
libtpu: 0.0.40
codegen_flags: <defaults>
</compile_context>

<pallas_src>
from functools import partial

import jax
import jax.numpy as jnp
from jax import lax
from jax.experimental import pallas as pl
from jax.experimental.pallas import tpu as pltpu


# ------------------------------ small helpers -------------------------------

def _round_up(v, m=128):
    return ((v + m - 1) // m) * m


def _pad2(x, rows, cols):
    return jnp.pad(x, ((0, rows - x.shape[0]), (0, cols - x.shape[1])))


def _pick_tile(dim, pref):
    """Largest multiple-of-128 tile <= pref that divides dim (dim % 128 == 0)."""
    t = min(pref, dim)
    while dim % t:
        t -= 128
    return t


def _fused_fits(n_p, c_in_p, c_out_p, budget=12 * 1024 * 1024):
    """Rough VMEM estimate for the fully fused kernel (params + IO + live)."""
    max_c = max(c_in_p, c_out_p, 128)
    param_b = 2 * (c_in_p * 128 + 3 * 128 * 128 + 128 * c_out_p) + 5 * 4 * max_c
    io_b = 2 * (n_p * n_p + n_p * c_in_p) + 4 * (n_p * c_out_p + n_p * n_p)
    live_b = 6 * n_p * max_c * 4 + 2 * n_p * n_p * 4
    return param_b + io_b + live_b <= budget


# --------------------- fused single-launch GAE kernel -----------------------

def _fused_gae_kernel(a_ref, x_ref,
                      w1_ref, b1_ref, w2_ref, b2_ref,
                      wa1_ref, ba1_ref, wa2_ref, ba2_ref,
                      wadj_ref, badj_ref,
                      xhat_ref, adjhat_ref):
    """Whole GAE forward on VMEM-resident padded operands (single invocation)."""
    a = a_ref[...]                                    # (Np, Np) bf16

    def gcn(h, w_ref, b_ref, relu):
        # A_hat @ (H @ W) + b, f32 accumulation on the MXU, f32 epilogue.
        xw = jnp.dot(h, w_ref[...], preferred_element_type=jnp.float32)
        out = jnp.dot(a, xw.astype(jnp.bfloat16),
                      preferred_element_type=jnp.float32)
        out = out + b_ref[...]
        if relu:
            out = jnp.maximum(out, 0.0)
        return out

    # Encoder
    h = gcn(x_ref[...], w1_ref, b1_ref, True).astype(jnp.bfloat16)
    z = gcn(h, w2_ref, b2_ref, True).astype(jnp.bfloat16)

    # Attribute decoder
    a1 = gcn(z, wa1_ref, ba1_ref, True).astype(jnp.bfloat16)
    xhat_ref[...] = gcn(a1, wa2_ref, ba2_ref, False).astype(xhat_ref.dtype)

    # Adjacency decoder: sigmoid(relu(GCNConv(z)) @ relu(GCNConv(z))^T)
    zadj = gcn(z, wadj_ref, badj_ref, True).astype(jnp.bfloat16)
    s = lax.dot_general(zadj, zadj,
                        dimension_numbers=(((1,), (1,)), ((), ())),
                        preferred_element_type=jnp.float32)
    adjhat_ref[...] = jax.nn.sigmoid(s).astype(adjhat_ref.dtype)


def _fused_gae(a_p, x_p, layer_params, n_p, c_out_p):
    (w1, b1), (w2, b2), (wa1, ba1), (wa2, ba2), (wadj, badj) = layer_params

    def bf(w):
        return w.astype(jnp.bfloat16)

    def bias2(b):
        return b.reshape(1, -1).astype(jnp.float32)

    vmem = pl.BlockSpec(memory_space=pltpu.MemorySpace.VMEM)
    return pl.pallas_call(
        _fused_gae_kernel,
        out_shape=(jax.ShapeDtypeStruct((n_p, c_out_p), jnp.float32),
                   jax.ShapeDtypeStruct((n_p, n_p), jnp.float32)),
        in_specs=[vmem] * 12,
        out_specs=(vmem, vmem),
    )(a_p, x_p,
      bf(w1), bias2(b1), bf(w2), bias2(b2),
      bf(wa1), bias2(ba1), bf(wa2), bias2(ba2),
      bf(wadj), bias2(badj))


# ------------------------ tiled fallback kernels ----------------------------

def _matmul_kernel(a_ref, b_ref, bias_ref, o_ref, acc_ref, *, relu):
    """One (TM, TN) output tile; k axis (axis 2) is the reduction."""
    k = pl.program_id(2)

    @pl.when(k == 0)
    def _():
        acc_ref[...] = jnp.zeros_like(acc_ref)

    acc_ref[...] += jnp.dot(a_ref[...], b_ref[...],
                            preferred_element_type=jnp.float32)

    @pl.when(k == pl.num_programs(2) - 1)
    def _():
        out = acc_ref[...] + bias_ref[...]
        if relu:
            out = jnp.maximum(out, 0.0)
        o_ref[...] = out.astype(o_ref.dtype)


def _tiled_matmul(a, b, bias=None, relu=False, out_dtype=jnp.bfloat16,
                  tm=256, tn=256, tk=512):
    """C = A @ B (+ bias, optional ReLU). A:(M,K), B:(K,N); dims % 128 == 0."""
    m, k = a.shape
    k2, n = b.shape
    assert k == k2
    tm = _pick_tile(m, tm)
    tn = _pick_tile(n, tn)
    tk = _pick_tile(k, tk)

    if bias is None:
        bias = jnp.zeros((n,), jnp.float32)
    bias2 = bias.reshape(1, n).astype(jnp.float32)

    grid = (m // tm, n // tn, k // tk)
    kernel = partial(_matmul_kernel, relu=relu)

    return pl.pallas_call(
        kernel,
        out_shape=jax.ShapeDtypeStruct((m, n), out_dtype),
        grid_spec=pltpu.PrefetchScalarGridSpec(
            num_scalar_prefetch=0,
            grid=grid,
            in_specs=[
                pl.BlockSpec((tm, tk), lambda i, j, kk: (i, kk)),
                pl.BlockSpec((tk, tn), lambda i, j, kk: (kk, j)),
                pl.BlockSpec((1, tn), lambda i, j, kk: (0, j)),
            ],
            out_specs=pl.BlockSpec((tm, tn), lambda i, j, kk: (i, j)),
            scratch_shapes=[pltpu.VMEM((tm, tn), jnp.float32)],
        ),
        compiler_params=pltpu.CompilerParams(
            dimension_semantics=("parallel", "parallel", "arbitrary")),
    )(a.astype(jnp.bfloat16), b.astype(jnp.bfloat16), bias2)


def _adj_decode_kernel(zi_ref, zj_ref, o_ref):
    s = lax.dot_general(zi_ref[...], zj_ref[...],
                        dimension_numbers=(((1,), (1,)), ((), ())),
                        preferred_element_type=jnp.float32)
    o_ref[...] = jax.nn.sigmoid(s).astype(o_ref.dtype)


def adj_decode(z, tm=256, tn=256):
    """sigmoid(Z @ Z^T), tiled over a 2-D output grid. z:(Np, Cp), dims % 128."""
    n_p, c = z.shape
    tm = _pick_tile(n_p, tm)
    tn = _pick_tile(n_p, tn)
    zb = z.astype(jnp.bfloat16)
    return pl.pallas_call(
        _adj_decode_kernel,
        out_shape=jax.ShapeDtypeStruct((n_p, n_p), jnp.float32),
        grid_spec=pltpu.PrefetchScalarGridSpec(
            num_scalar_prefetch=0,
            grid=(n_p // tm, n_p // tn),
            in_specs=[
                pl.BlockSpec((tm, c), lambda i, j: (i, 0)),
                pl.BlockSpec((tn, c), lambda i, j: (j, 0)),
            ],
            out_specs=pl.BlockSpec((tm, tn), lambda i, j: (i, j)),
        ),
        compiler_params=pltpu.CompilerParams(
            dimension_semantics=("parallel", "parallel")),
    )(zb, zb)


def gcn_layer(a_hat_p, x_p, w_p, b_p, relu, out_dtype=jnp.bfloat16):
    """GCNConv on padded operands (tiled path): A_hat @ X @ W + b (+ReLU)."""
    c_in, c_out = w_p.shape
    if c_in < c_out:
        ax = _tiled_matmul(a_hat_p, x_p)                       # (Np, C_in)
        return _tiled_matmul(ax, w_p, bias=b_p, relu=relu, out_dtype=out_dtype)
    else:
        xw = _tiled_matmul(x_p, w_p)                           # (Np, C_out)
        return _tiled_matmul(a_hat_p, xw, bias=b_p, relu=relu,
                             out_dtype=out_dtype)


# ------------------------------ plain-JAX glue ------------------------------

def normalized_adjacency(edge_index, num_nodes):
    """Dense D^{-1/2}(A+I)D^{-1/2}, matching PyG gcn_norm semantics."""
    src, dst = edge_index[0], edge_index[1]
    adj = jnp.zeros((num_nodes, num_nodes), jnp.float32)
    adj = adj.at[dst, src].add(1.0)                       # message src -> dst
    adj = adj + jnp.eye(num_nodes, dtype=jnp.float32)     # self-loops
    deg = adj.sum(axis=1)
    d_inv_sqrt = jnp.where(deg > 0, 1.0 / jnp.sqrt(deg), 0.0)
    return d_inv_sqrt[:, None] * adj * d_inv_sqrt[None, :]


def glorot(key, shape):
    fan_in, fan_out = shape
    limit = jnp.sqrt(6.0 / (fan_in + fan_out))
    return jax.random.uniform(key, shape, jnp.float32, -limit, limit)


def init_gae_params(key, in_channels, out_channels):
    ks = jax.random.split(key, 5)
    return {
        # Encoder: GCNConv(in,128), GCNConv(128,64)
        "enc1_w": glorot(ks[0], (in_channels, 128)),
        "enc1_b": jnp.zeros((128,), jnp.float32),
        "enc2_w": glorot(ks[1], (128, 64)),
        "enc2_b": jnp.zeros((64,), jnp.float32),
        # AttributeDecoder: GCNConv(64,128), GCNConv(128,out)
        "attr1_w": glorot(ks[2], (64, 128)),
        "attr1_b": jnp.zeros((128,), jnp.float32),
        "attr2_w": glorot(ks[3], (128, out_channels)),
        "attr2_b": jnp.zeros((out_channels,), jnp.float32),
        # AdjacencyDecoder: GCNConv(64,64)
        "adj_w": glorot(ks[4], (64, 64)),
        "adj_b": jnp.zeros((64,), jnp.float32),
    }


def _padded_layer_params(w, b):
    cin_p = _round_up(w.shape[0])
    cout_p = _round_up(w.shape[1])
    w_p = _pad2(w, cin_p, cout_p)                       # zero-padded -> exact
    b_p = jnp.pad(b, (0, cout_p - b.shape[0])).astype(jnp.float32)
    return w_p, b_p


def gae_forward(params, x, edge_index):
    n, c_in = x.shape
    c_out = params["attr2_w"].shape[1]
    n_p = _round_up(n)
    c_in_p = _round_up(c_in)

    # A_hat built in f32, padded and stored as bf16 (it is reused 5x).
    a_hat = normalized_adjacency(edge_index, n)
    a_p = _pad2(a_hat, n_p, n_p).astype(jnp.bfloat16)
    x_p = _pad2(x, n_p, c_in_p).astype(jnp.bfloat16)

    w1, b1 = _padded_layer_params(params["enc1_w"], params["enc1_b"])
    w2, b2 = _padded_layer_params(params["enc2_w"], params["enc2_b"])
    wa1, ba1 = _padded_layer_params(params["attr1_w"], params["attr1_b"])
    wa2, ba2 = _padded_layer_params(params["attr2_w"], params["attr2_b"])
    wadj, badj = _padded_layer_params(params["adj_w"], params["adj_b"])
    c_out_p = wa2.shape[1]

    if _fused_fits(n_p, c_in_p, c_out_p):
        # Single kernel launch; all activations stay in VMEM.
        x_hat_p, adj_hat_p = _fused_gae(
            a_p, x_p,
            [(w1, b1), (w2, b2), (wa1, ba1), (wa2, ba2), (wadj, badj)],
            n_p, c_out_p)
    else:
        # Tiled per-layer path for graphs that don't fit in VMEM.
        h = gcn_layer(a_p, x_p, w1, b1, relu=True)
        z = gcn_layer(a_p, h, w2, b2, relu=True)
        a1 = gcn_layer(a_p, z, wa1, ba1, relu=True)
        x_hat_p = gcn_layer(a_p, a1, wa2, ba2, relu=False,
                            out_dtype=jnp.float32)
        zadj = gcn_layer(a_p, z, wadj, badj, relu=True)
        adj_hat_p = adj_decode(zadj)

    return x_hat_p[:n, :c_out], adj_hat_p[:n, :n]


def _gae_forward_ref(params, x, edge_index):
    """Pure-JAX f32 reference for correctness checking."""
    n = x.shape[0]
    a = normalized_adjacency(edge_index, n)

    def layer(h, w, b, relu):
        out = a @ (h @ w) + b
        return jnp.maximum(out, 0.0) if relu else out

    h = layer(x, params["enc1_w"], params["enc1_b"], True)
    z = layer(h, params["enc2_w"], params["enc2_b"], True)
    a1 = layer(z, params["attr1_w"], params["attr1_b"], True)
    x_hat = layer(a1, params["attr2_w"], params["attr2_b"], False)
    zadj = layer(z, params["adj_w"], params["adj_b"], True)
    adj_hat = jax.nn.sigmoid(zadj @ zadj.T)
    return x_hat, adj_hat


if __name__ == "__main__":
    key = jax.random.PRNGKey(0)
    k_x, k_p = jax.random.split(key)

    num_nodes = 8
    in_channels = 16
    out_channels = 16

    # Node features (N, C_in)
    x = jax.random.normal(k_x, (num_nodes, in_channels), jnp.float32)

    # Deterministic ring graph (both directions), edge_index shape (2, E)
    src = jnp.arange(num_nodes, dtype=jnp.int32)
    dst = (src + 1) % num_nodes
    edge_index = jnp.stack(
        [jnp.concatenate([src, dst]), jnp.concatenate([dst, src])], axis=0
    )

    params = init_gae_params(k_p, in_channels, out_channels)

    fwd = jax.jit(gae_forward)
    x_hat, adj_hat = fwd(params, x, edge_index)
    jax.block_until_ready(x_hat)
    jax.block_until_ready(adj_hat)

    assert x_hat.shape == (num_nodes, out_channels)
    assert adj_hat.shape == (num_nodes, num_nodes)

    # Loose-tolerance check vs. f32 reference (kernel uses bf16 MXU operands).
    x_ref, adj_ref = _gae_forward_ref(params, x, edge_index)
    assert jnp.allclose(x_hat, x_ref, atol=1e-1, rtol=1e-1)
    assert jnp.allclose(adj_hat, adj_ref, atol=1e-1, rtol=1e-1)

    print("KERNEL_OK")
</pallas_src>

<mosaic_0001>
module attributes {stable_mosaic.version = 11 : i64} {
  func.func @_fused_gae_kernel(%arg0: memref<128x128xbf16, #tpu.memory_space<vmem>>, %arg1: memref<128x128xbf16, #tpu.memory_space<vmem>>, %arg2: memref<128x128xbf16, #tpu.memory_space<vmem>>, %arg3: memref<1x128xf32, #tpu.memory_space<vmem>>, %arg4: memref<128x128xbf16, #tpu.memory_space<vmem>>, %arg5: memref<1x128xf32, #tpu.memory_space<vmem>>, %arg6: memref<128x128xbf16, #tpu.memory_space<vmem>>, %arg7: memref<1x128xf32, #tpu.memory_space<vmem>>, %arg8: memref<128x128xbf16, #tpu.memory_space<vmem>>, %arg9: memref<1x128xf32, #tpu.memory_space<vmem>>, %arg10: memref<128x128xbf16, #tpu.memory_space<vmem>>, %arg11: memref<1x128xf32, #tpu.memory_space<vmem>>, %arg12: memref<128x128xf32, #tpu.memory_space<vmem>>, %arg13: memref<128x128xf32, #tpu.memory_space<vmem>>) attributes {dimension_semantics = [], scalar_prefetch = 0 : i64, scratch_operands = 0 : i64, tpu.core_type = #tpu.core_type<tc>} {
    %c0 = arith.constant 0 : index
    %c0_0 = arith.constant 0 : index
    %0 = vector.load %arg0[%c0, %c0_0] : memref<128x128xbf16, #tpu.memory_space<vmem>>, vector<128x128xbf16>
    %c0_1 = arith.constant 0 : index
    %c0_2 = arith.constant 0 : index
    %1 = vector.load %arg1[%c0_1, %c0_2] : memref<128x128xbf16, #tpu.memory_space<vmem>>, vector<128x128xbf16>
    %c0_3 = arith.constant 0 : index
    %c0_4 = arith.constant 0 : index
    %2 = vector.load %arg2[%c0_3, %c0_4] : memref<128x128xbf16, #tpu.memory_space<vmem>>, vector<128x128xbf16>
    %cst = arith.constant dense<0.000000e+00> : vector<128x128xf32>
    %3 = tpu.matmul %1, %2, %cst {dimension_numbers = #tpu.dot_dimension_numbers<[1], [0], [0], [1], [0, 0, 1, 1], [], []>} : vector<128x128xbf16>, vector<128x128xbf16>, vector<128x128xf32> -> vector<128x128xf32>
    %4 = arith.truncf %3 : vector<128x128xf32> to vector<128x128xbf16>
    %cst_5 = arith.constant dense<0.000000e+00> : vector<128x128xf32>
    %5 = tpu.matmul %0, %4, %cst_5 {dimension_numbers = #tpu.dot_dimension_numbers<[1], [0], [0], [1], [0, 0, 1, 1], [], []>} : vector<128x128xbf16>, vector<128x128xbf16>, vector<128x128xf32> -> vector<128x128xf32>
    %c0_6 = arith.constant 0 : index
    %c0_7 = arith.constant 0 : index
    %6 = vector.load %arg3[%c0_6, %c0_7] : memref<1x128xf32, #tpu.memory_space<vmem>>, vector<1x128xf32>
    %7 = vector.broadcast %6 : vector<1x128xf32> to vector<128x128xf32>
    %8 = arith.addf %5, %7 : vector<128x128xf32>
    %cst_8 = arith.constant 0.000000e+00 : f32
    %9 = vector.broadcast %cst_8 : f32 to vector<128x128xf32>
    %10 = arith.maximumf %8, %9 : vector<128x128xf32>
    %11 = arith.truncf %10 : vector<128x128xf32> to vector<128x128xbf16>
    %c0_9 = arith.constant 0 : index
    %c0_10 = arith.constant 0 : index
    %12 = vector.load %arg4[%c0_9, %c0_10] : memref<128x128xbf16, #tpu.memory_space<vmem>>, vector<128x128xbf16>
    %cst_11 = arith.constant dense<0.000000e+00> : vector<128x128xf32>
    %13 = tpu.matmul %11, %12, %cst_11 {dimension_numbers = #tpu.dot_dimension_numbers<[1], [0], [0], [1], [0, 0, 1, 1], [], []>} : vector<128x128xbf16>, vector<128x128xbf16>, vector<128x128xf32> -> vector<128x128xf32>
    %14 = arith.truncf %13 : vector<128x128xf32> to vector<128x128xbf16>
    %cst_12 = arith.constant dense<0.000000e+00> : vector<128x128xf32>
    %15 = tpu.matmul %0, %14, %cst_12 {dimension_numbers = #tpu.dot_dimension_numbers<[1], [0], [0], [1], [0, 0, 1, 1], [], []>} : vector<128x128xbf16>, vector<128x128xbf16>, vector<128x128xf32> -> vector<128x128xf32>
    %c0_13 = arith.constant 0 : index
    %c0_14 = arith.constant 0 : index
    %16 = vector.load %arg5[%c0_13, %c0_14] : memref<1x128xf32, #tpu.memory_space<vmem>>, vector<1x128xf32>
    %17 = vector.broadcast %16 : vector<1x128xf32> to vector<128x128xf32>
    %18 = arith.addf %15, %17 : vector<128x128xf32>
    %cst_15 = arith.constant 0.000000e+00 : f32
    %19 = vector.broadcast %cst_15 : f32 to vector<128x128xf32>
    %20 = arith.maximumf %18, %19 : vector<128x128xf32>
    %21 = arith.truncf %20 : vector<128x128xf32> to vector<128x128xbf16>
    %c0_16 = arith.constant 0 : index
    %c0_17 = arith.constant 0 : index
    %22 = vector.load %arg6[%c0_16, %c0_17] : memref<128x128xbf16, #tpu.memory_space<vmem>>, vector<128x128xbf16>
    %cst_18 = arith.constant dense<0.000000e+00> : vector<128x128xf32>
    %23 = tpu.matmul %21, %22, %cst_18 {dimension_numbers = #tpu.dot_dimension_numbers<[1], [0], [0], [1], [0, 0, 1, 1], [], []>} : vector<128x128xbf16>, vector<128x128xbf16>, vector<128x128xf32> -> vector<128x128xf32>
    %24 = arith.truncf %23 : vector<128x128xf32> to vector<128x128xbf16>
    %cst_19 = arith.constant dense<0.000000e+00> : vector<128x128xf32>
    %25 = tpu.matmul %0, %24, %cst_19 {dimension_numbers = #tpu.dot_dimension_numbers<[1], [0], [0], [1], [0, 0, 1, 1], [], []>} : vector<128x128xbf16>, vector<128x128xbf16>, vector<128x128xf32> -> vector<128x128xf32>
    %c0_20 = arith.constant 0 : index
    %c0_21 = arith.constant 0 : index
    %26 = vector.load %arg7[%c0_20, %c0_21] : memref<1x128xf32, #tpu.memory_space<vmem>>, vector<1x128xf32>
    %27 = vector.broadcast %26 : vector<1x128xf32> to vector<128x128xf32>
    %28 = arith.addf %25, %27 : vector<128x128xf32>
    %cst_22 = arith.constant 0.000000e+00 : f32
    %29 = vector.broadcast %cst_22 : f32 to vector<128x128xf32>
    %30 = arith.maximumf %28, %29 : vector<128x128xf32>
    %31 = arith.truncf %30 : vector<128x128xf32> to vector<128x128xbf16>
    %c0_23 = arith.constant 0 : index
    %c0_24 = arith.constant 0 : index
    %32 = vector.load %arg8[%c0_23, %c0_24] : memref<128x128xbf16, #tpu.memory_space<vmem>>, vector<128x128xbf16>
    %cst_25 = arith.constant dense<0.000000e+00> : vector<128x128xf32>
    %33 = tpu.matmul %31, %32, %cst_25 {dimension_numbers = #tpu.dot_dimension_numbers<[1], [0], [0], [1], [0, 0, 1, 1], [], []>} : vector<128x128xbf16>, vector<128x128xbf16>, vector<128x128xf32> -> vector<128x128xf32>
    %34 = arith.truncf %33 : vector<128x128xf32> to vector<128x128xbf16>
    %cst_26 = arith.constant dense<0.000000e+00> : vector<128x128xf32>
    %35 = tpu.matmul %0, %34, %cst_26 {dimension_numbers = #tpu.dot_dimension_numbers<[1], [0], [0], [1], [0, 0, 1, 1], [], []>} : vector<128x128xbf16>, vector<128x128xbf16>, vector<128x128xf32> -> vector<128x128xf32>
    %c0_27 = arith.constant 0 : index
    %c0_28 = arith.constant 0 : index
    %36 = vector.load %arg9[%c0_27, %c0_28] : memref<1x128xf32, #tpu.memory_space<vmem>>, vector<1x128xf32>
    %37 = vector.broadcast %36 : vector<1x128xf32> to vector<128x128xf32>
    %38 = arith.addf %35, %37 : vector<128x128xf32>
    %c0_29 = arith.constant 0 : index
    %c0_30 = arith.constant 0 : index
    %39 = vector.load %arg12[%c0_29, %c0_30] : memref<128x128xf32, #tpu.memory_space<vmem>>, vector<128x128xf32>
    tpu.vector_store %arg12[%c0_29, %c0_30], %38 {strides = array<i32>} : memref<128x128xf32, #tpu.memory_space<vmem>>, vector<128x128xf32>,
    %c0_31 = arith.constant 0 : index
    %c0_32 = arith.constant 0 : index
    %40 = vector.load %arg10[%c0_31, %c0_32] : memref<128x128xbf16, #tpu.memory_space<vmem>>, vector<128x128xbf16>
    %cst_33 = arith.constant dense<0.000000e+00> : vector<128x128xf32>
    %41 = tpu.matmul %21, %40, %cst_33 {dimension_numbers = #tpu.dot_dimension_numbers<[1], [0], [0], [1], [0, 0, 1, 1], [], []>} : vector<128x128xbf16>, vector<128x128xbf16>, vector<128x128xf32> -> vector<128x128xf32>
    %42 = arith.truncf %41 : vector<128x128xf32> to vector<128x128xbf16>
    %cst_34 = arith.constant dense<0.000000e+00> : vector<128x128xf32>
    %43 = tpu.matmul %0, %42, %cst_34 {dimension_numbers = #tpu.dot_dimension_numbers<[1], [0], [0], [1], [0, 0, 1, 1], [], []>} : vector<128x128xbf16>, vector<128x128xbf16>, vector<128x128xf32> -> vector<128x128xf32>
    %c0_35 = arith.constant 0 : index
    %c0_36 = arith.constant 0 : index
    %44 = vector.load %arg11[%c0_35, %c0_36] : memref<1x128xf32, #tpu.memory_space<vmem>>, vector<1x128xf32>
    %45 = vector.broadcast %44 : vector<1x128xf32> to vector<128x128xf32>
    %46 = arith.addf %43, %45 : vector<128x128xf32>
    %cst_37 = arith.constant 0.000000e+00 : f32
    %47 = vector.broadcast %cst_37 : f32 to vector<128x128xf32>
    %48 = arith.maximumf %46, %47 : vector<128x128xf32>
    %49 = arith.truncf %48 : vector<128x128xf32> to vector<128x128xbf16>
    %cst_38 = arith.constant dense<0.000000e+00> : vector<128x128xf32>
    %50 = tpu.matmul %49, %49, %cst_38 {dimension_numbers = #tpu.dot_dimension_numbers<[1], [1], [0], [0], [0, 0, 1, 0], [], []>} : vector<128x128xbf16>, vector<128x128xbf16>, vector<128x128xf32> -> vector<128x128xf32>
    %51 = arith.negf %50 : vector<128x128xf32>
    %52 = math.exp %51 : vector<128x128xf32>
    %cst_39 = arith.constant 1.000000e+00 : f32
    %53 = vector.broadcast %cst_39 : f32 to vector<128x128xf32>
    %54 = arith.addf %53, %52 : vector<128x128xf32>
    %55 = arith.divf %53, %54 : vector<128x128xf32>
    %c0_40 = arith.constant 0 : index
    %c0_41 = arith.constant 0 : index
    %56 = vector.load %arg13[%c0_40, %c0_41] : memref<128x128xf32, #tpu.memory_space<vmem>>, vector<128x128xf32>
    tpu.vector_store %arg13[%c0_40, %c0_41], %55 {strides = array<i32>} : memref<128x128xf32, #tpu.memory_space<vmem>>, vector<128x128xf32>,
    return
  }
}

</mosaic_0001>

<llo_original>
// kernel: gae_forward.1
$region0: #{gae_forward.1}
  #allocation0 [shape = 'u32[]', space=smem, size = 0x4, offset = 0x4, fixed_abs, tag = 'smem constant byte address 0x4 - core index']
  #allocation1 [shape = 'u32[72,128]{1,0:T(1,128)}', space=vmem, size = 0x9000, scoped, tag = 'internal scratch']
  %s0 = inlined_call_operand.vmem [shape: bf16[128,128], index: 0, kind: input, shape index: {}]
  %s1 = inlined_call_operand.vmem [shape: bf16[128,128], index: 1, kind: input, shape index: {}]
  %s2 = inlined_call_operand.vmem [shape: bf16[128,128], index: 2, kind: input, shape index: {}]
  %s3 = inlined_call_operand.vmem [shape: f32[1,128], index: 3, kind: input, shape index: {}]
  %s4 = inlined_call_operand.vmem [shape: bf16[128,128], index: 4, kind: input, shape index: {}]
  %s5 = inlined_call_operand.vmem [shape: f32[1,128], index: 5, kind: input, shape index: {}]
  %s6 = inlined_call_operand.vmem [shape: bf16[128,128], index: 6, kind: input, shape index: {}]
  %s7 = inlined_call_operand.vmem [shape: f32[1,128], index: 7, kind: input, shape index: {}]
  %s8 = inlined_call_operand.vmem [shape: bf16[128,128], index: 8, kind: input, shape index: {}]
  %s9 = inlined_call_operand.vmem [shape: f32[1,128], index: 9, kind: input, shape index: {}]
  %s10 = inlined_call_operand.vmem [shape: bf16[128,128], index: 10, kind: input, shape index: {}]
  %s11 = inlined_call_operand.vmem [shape: f32[1,128], index: 11, kind: input, shape index: {}]
  %s12 = inlined_call_operand.vmem [shape: f32[128,128], index: 12, kind: output, shape index: {0}]
  %s13 = inlined_call_operand.vmem [shape: f32[128,128], index: 13, kind: output, shape index: {1}]
  %14 = xla_tuple %s12, %s13
  %s15 = sld [smem:[#allocation0]]
  $region66: #{gae_forward.1} parent=0
    _
  %s17 = ssub.s32 1, %s15
  %s18 = scalar_select 0, %s17, %s15
  // Predicated region
  $region2: #{gae_forward.1} parent=0 // pred_check
    _
  $region3: #{gae_forward.1} parent=0 // pred_check_branch
    %20 = sbr.rel (0) target = $region5
  $region4: #{gae_forward.1} parent=0 // pred_region
    _
  $region5: #{gae_forward.1} parent=0 // pred_fallthru
    _
  // Predicated region
  $region6: #{gae_forward.1} parent=0 // pred_check
    _
  $region7: #{gae_forward.1} parent=0 // pred_check_branch
    %22 = sbr.rel (0) target = $region9
  $region8: #{gae_forward.1} parent=0 // pred_region
    _
  $region9: #{gae_forward.1} parent=0 // pred_fallthru
    _
  // Predicated region
  $region10: #{gae_forward.1} parent=0 // pred_check
    _
  $region11: #{gae_forward.1} parent=0 // pred_check_branch
    %24 = sbr.rel (0) target = $region13
  $region12: #{gae_forward.1} parent=0 // pred_region
    _
  $region13: #{gae_forward.1} parent=0 // pred_fallthru
    _
  // Predicated region
  $region14: #{gae_forward.1} parent=0 // pred_check
    _
  $region15: #{gae_forward.1} parent=0 // pred_check_branch
    %26 = sbr.rel (0) target = $region17
  $region16: #{gae_forward.1} parent=0 // pred_region
    _
  $region17: #{gae_forward.1} parent=0 // pred_fallthru
    _
  // Predicated region
  $region18: #{gae_forward.1} parent=0 // pred_check
    _
  $region19: #{gae_forward.1} parent=0 // pred_check_branch
    %28 = sbr.rel (0) target = $region21
  $region20: #{gae_forward.1} parent=0 // pred_region
    _
  $region21: #{gae_forward.1} parent=0 // pred_fallthru
    _
  // Predicated region
  $region22: #{gae_forward.1} parent=0 // pred_check
    _
  $region23: #{gae_forward.1} parent=0 // pred_check_branch
    %30 = sbr.rel (0) target = $region25
  $region24: #{gae_forward.1} parent=0 // pred_region
    _
  $region25: #{gae_forward.1} parent=0 // pred_fallthru
    _
  // Predicated region
  $region26: #{gae_forward.1} parent=0 // pred_check
    _
  $region27: #{gae_forward.1} parent=0 // pred_check_branch
    %32 = sbr.rel (0) target = $region29
  $region28: #{gae_forward.1} parent=0 // pred_region
    _
  $region29: #{gae_forward.1} parent=0 // pred_fallthru
    _
  // Predicated region
  $region30: #{gae_forward.1} parent=0 // pred_check
    _
  $region31: #{gae_forward.1} parent=0 // pred_check_branch
    %34 = sbr.rel (0) target = $region33
  $region32: #{gae_forward.1} parent=0 // pred_region
    _
  $region33: #{gae_forward.1} parent=0 // pred_fallthru
    _
  // Predicated region
  $region34: #{gae_forward.1} parent=0 // pred_check
    _
  $region35: #{gae_forward.1} parent=0 // pred_check_branch
    %36 = sbr.rel (0) target = $region37
  $region36: #{gae_forward.1} parent=0 // pred_region
    _
  $region37: #{gae_forward.1} parent=0 // pred_fallthru
    _
  // Predicated region
  $region38: #{gae_forward.1} parent=0 // pred_check
    _
  $region39: #{gae_forward.1} parent=0 // pred_check_branch
    %38 = sbr.rel (0) target = $region41
  $region40: #{gae_forward.1} parent=0 // pred_region
    _
  $region41: #{gae_forward.1} parent=0 // pred_fallthru
    _
  // Predicated region
  $region42: #{gae_forward.1} parent=0 // pred_check
    _
  $region43: #{gae_forward.1} parent=0 // pred_check_branch
    %40 = sbr.rel (0) target = $region45
  $region44: #{gae_forward.1} parent=0 // pred_region
    _
  $region45: #{gae_forward.1} parent=0 // pred_fallthru
    _
  // Predicated region
  $region46: #{gae_forward.1} parent=0 // pred_check
    _
  $region47: #{gae_forward.1} parent=0 // pred_check_branch
    %42 = sbr.rel (0) target = $region49
  $region48: #{gae_forward.1} parent=0 // pred_region
    _
  $region49: #{gae_forward.1} parent=0 // pred_fallthru
    _
  %v43 = vld [vmem:[%s0] sm:$0xf]
  %v44 = vld [vmem:[%s0 + $0x4] sm:$0xf]
  %v45 = vld [vmem:[%s0 + $0x8] sm:$0xf]
  %v46 = vld [vmem:[%s0 + $0xc] sm:$0xf]
  %v47 = vld [vmem:[%s0 + $0x10] sm:$0xf]
  %v48 = vld [vmem:[%s0 + $0x14] sm:$0xf]
  %v49 = vld [vmem:[%s0 + $0x18] sm:$0xf]
  %v50 = vld [vmem:[%s0 + $0x1c] sm:$0xf]
  %v51 = vld [vmem:[%s0 + $0x20] sm:$0xf]
  %v52 = vld [vmem:[%s0 + $0x24] sm:$0xf]
  %v53 = vld [vmem:[%s0 + $0x28] sm:$0xf]
  %v54 = vld [vmem:[%s0 + $0x2c] sm:$0xf]
  %v55 = vld [vmem:[%s0 + $0x30] sm:$0xf]
  %v56 = vld [vmem:[%s0 + $0x34] sm:$0xf]
  %v57 = vld [vmem:[%s0 + $0x38] sm:$0xf]
  %v58 = vld [vmem:[%s0 + $0x3c] sm:$0xf]
  %v59 = vld [vmem:[%s1] sm:$0xf]
  %v60 = vld [vmem:[%s1 + $0x4] sm:$0xf]
  %v61 = vld [vmem:[%s1 + $0x8] sm:$0xf]
  %v62 = vld [vmem:[%s1 + $0xc] sm:$0xf]
  %v63 = vld [vmem:[%s1 + $0x10] sm:$0xf]
  %v64 = vld [vmem:[%s1 + $0x14] sm:$0xf]
  %v65 = vld [vmem:[%s1 + $0x18] sm:$0xf]
  %v66 = vld [vmem:[%s1 + $0x1c] sm:$0xf]
  %v67 = vld [vmem:[%s1 + $0x20] sm:$0xf]
  %v68 = vld [vmem:[%s1 + $0x24] sm:$0xf]
  %v69 = vld [vmem:[%s1 + $0x28] sm:$0xf]
  %v70 = vld [vmem:[%s1 + $0x2c] sm:$0xf]
  %v71 = vld [vmem:[%s1 + $0x30] sm:$0xf]
  %v72 = vld [vmem:[%s1 + $0x34] sm:$0xf]
  %v73 = vld [vmem:[%s1 + $0x38] sm:$0xf]
  %v74 = vld [vmem:[%s1 + $0x3c] sm:$0xf]
  %v75 = vld [vmem:[%s2] sm:$0xf]
  %v76 = vld [vmem:[%s2 + $0x4] sm:$0xf]
  %v77 = vld [vmem:[%s2 + $0x8] sm:$0xf]
  %v78 = vld [vmem:[%s2 + $0xc] sm:$0xf]
  %v79 = vld [vmem:[%s2 + $0x10] sm:$0xf]
  %v80 = vld [vmem:[%s2 + $0x14] sm:$0xf]
  %v81 = vld [vmem:[%s2 + $0x18] sm:$0xf]
  %v82 = vld [vmem:[%s2 + $0x1c] sm:$0xf]
  %v83 = vld [vmem:[%s2 + $0x20] sm:$0xf]
  %v84 = vld [vmem:[%s2 + $0x24] sm:$0xf]
  %v85 = vld [vmem:[%s2 + $0x28] sm:$0xf]
  %v86 = vld [vmem:[%s2 + $0x2c] sm:$0xf]
  %v87 = vld [vmem:[%s2 + $0x30] sm:$0xf]
  %v88 = vld [vmem:[%s2 + $0x34] sm:$0xf]
  %v89 = vld [vmem:[%s2 + $0x38] sm:$0xf]
  %v90 = vld [vmem:[%s2 + $0x3c] sm:$0xf]
  %v107 = vunpack.c.l.b16 %v59
  %v108 = vunpack.c.l.b16 %v60
  %v109 = vunpack.c.l.b16 %v61
  %v110 = vunpack.c.l.b16 %v62
  %v111 = vunpack.c.l.b16 %v63
  %v112 = vunpack.c.l.b16 %v64
  %v113 = vunpack.c.l.b16 %v65
  %v114 = vunpack.c.l.b16 %v66
  %v115 = vunpack.c.l.b16 %v67
  %v116 = vunpack.c.l.b16 %v68
  %v117 = vunpack.c.l.b16 %v69
  %v118 = vunpack.c.l.b16 %v70
  %v119 = vunpack.c.l.b16 %v71
  %v120 = vunpack.c.l.b16 %v72
  %v121 = vunpack.c.l.b16 %v73
  %v122 = vunpack.c.l.b16 %v74
  %v123 = vpack.c.b16 %v108, %v107
  %v124 = vpack.c.b16 %v110, %v109
  %v125 = vpack.c.b16 %v112, %v111
  %v126 = vpack.c.b16 %v114, %v113
  %v127 = vpack.c.b16 %v116, %v115
  %v128 = vpack.c.b16 %v118, %v117
  %v129 = vpack.c.b16 %v120, %v119
  %v130 = vpack.c.b16 %v122, %v121
  %v155 = vunpack.c.l.b16 %v75
  %v156 = vunpack.c.l.b16 %v76
  %v157 = vunpack.c.l.b16 %v77
  %v158 = vunpack.c.l.b16 %v78
  %v159 = vunpack.c.l.b16 %v79
  %v160 = vunpack.c.l.b16 %v80
  %v161 = vunpack.c.l.b16 %v81
  %v162 = vunpack.c.l.b16 %v82
  %v163 = vunpack.c.l.b16 %v83
  %v164 = vunpack.c.l.b16 %v84
  %v165 = vunpack.c.l.b16 %v85
  %v166 = vunpack.c.l.b16 %v86
  %v167 = vunpack.c.l.b16 %v87
  %v168 = vunpack.c.l.b16 %v88
  %v169 = vunpack.c.l.b16 %v89
  %v170 = vunpack.c.l.b16 %v90
  %v171 = vpack.c.b16 %v156, %v155
  %v172 = vpack.c.b16 %v158, %v157
  %v173 = vpack.c.b16 %v160, %v159
  %v174 = vpack.c.b16 %v162, %v161
  %v175 = vpack.c.b16 %v164, %v163
  %v176 = vpack.c.b16 %v166, %v165
  %v177 = vpack.c.b16 %v168, %v167
  %v178 = vpack.c.b16 %v170, %v169
  %187 = vmatpush.bf16.msra.mxu0 %v178
  %188 = vmatpush.bf16.msra.mxu0 %v177
  %189 = vmatpush.bf16.msra.mxu0 %v176
  %190 = vmatpush.bf16.msra.mxu0 %v175
  %191 = vmatpush.bf16.msra.mxu0 %v174
  %192 = vmatpush.bf16.msra.mxu0 %v173
  %193 = vmatpush.bf16.msra.mxu0 %v172
  %194 = vmatpush.bf16.msra.mxu0 %v171
  %195 = vmatmul.bf16.gmra.mxu0 %v123
  %v196 = vpop.f32.mrf.mxu0
  %v197 = vadd.f32 0.0, %v196
  %v198 = vpop.f32.mrf.mxu0
  %v199 = vadd.f32 0.0, %v198
  %200 = vmatmul.bf16.gmra.mxu0 %v124
  %v201 = vpop.f32.mrf.mxu0
  %v202 = vadd.f32 0.0, %v201
  %v203 = vpop.f32.mrf.mxu0
  %v204 = vadd.f32 0.0, %v203
  %205 = vmatmul.bf16.gmra.mxu0 %v125
  %v206 = vpop.f32.mrf.mxu0
  %v207 = vadd.f32 0.0, %v206
  %v208 = vpop.f32.mrf.mxu0
  %v209 = vadd.f32 0.0, %v208
  %210 = vmatmul.bf16.gmra.mxu0 %v126
  %v211 = vpop.f32.mrf.mxu0
  %v212 = vadd.f32 0.0, %v211
  %v213 = vpop.f32.mrf.mxu0
  %v214 = vadd.f32 0.0, %v213
  %215 = vmatmul.bf16.gmra.mxu0 %v127
  %v216 = vpop.f32.mrf.mxu0
  %v217 = vadd.f32 0.0, %v216
  %v218 = vpop.f32.mrf.mxu0
  %v219 = vadd.f32 0.0, %v218
  %220 = vmatmul.bf16.gmra.mxu0 %v128
  %v221 = vpop.f32.mrf.mxu0
  %v222 = vadd.f32 0.0, %v221
  %v223 = vpop.f32.mrf.mxu0
  %v224 = vadd.f32 0.0, %v223
  %225 = vmatmul.bf16.gmra.mxu0 %v129
  %v226 = vpop.f32.mrf.mxu0
  %v227 = vadd.f32 0.0, %v226
  %v228 = vpop.f32.mrf.mxu0
  %v229 = vadd.f32 0.0, %v228
  %230 = vmatmul.bf16.gmra.mxu0 %v130
  %v231 = vpop.f32.mrf.mxu0
  %v232 = vadd.f32 0.0, %v231
  %v233 = vpop.f32.mrf.mxu0
  %v234 = vadd.f32 0.0, %v233
  %235 = vdwg.mxu0
  %v236 = vpack.c.bf16 %v199, %v197
  %v237 = vpack.c.bf16 %v204, %v202
  %v238 = vpack.c.bf16 %v209, %v207
  %v239 = vpack.c.bf16 %v214, %v212
  %v240 = vpack.c.bf16 %v219, %v217
  %v241 = vpack.c.bf16 %v224, %v222
  %v242 = vpack.c.bf16 %v229, %v227
  %v243 = vpack.c.bf16 %v234, %v232
  %v244 = vld [vmem:[%s3] sm:$0x1]
  %v246 = vperm.slane %v244, 0
  %v264 = vunpack.c.l.b16 %v43
  %v265 = vunpack.c.l.b16 %v44
  %v266 = vunpack.c.l.b16 %v45
  %v267 = vunpack.c.l.b16 %v46
  %v268 = vunpack.c.l.b16 %v47
  %v269 = vunpack.c.l.b16 %v48
  %v270 = vunpack.c.l.b16 %v49
  %v271 = vunpack.c.l.b16 %v50
  %v272 = vunpack.c.l.b16 %v51
  %v273 = vunpack.c.l.b16 %v52
  %v274 = vunpack.c.l.b16 %v53
  %v275 = vunpack.c.l.b16 %v54
  %v276 = vunpack.c.l.b16 %v55
  %v277 = vunpack.c.l.b16 %v56
  %v278 = vunpack.c.l.b16 %v57
  %v279 = vunpack.c.l.b16 %v58
  %v280 = vpack.c.b16 %v265, %v264
  %v281 = vpack.c.b16 %v267, %v266
  %v282 = vpack.c.b16 %v269, %v268
  %v283 = vpack.c.b16 %v271, %v270
  %v284 = vpack.c.b16 %v273, %v272
  %v285 = vpack.c.b16 %v275, %v274
  %v286 = vpack.c.b16 %v277, %v276
  %v287 = vpack.c.b16 %v279, %v278
  %296 = vmatpush.bf16.msra.mxu0 %v243
  %297 = vmatpush.bf16.msra.mxu0 %v242
  %298 = vmatpush.bf16.msra.mxu0 %v241
  %299 = vmatpush.bf16.msra.mxu0 %v240
  %300 = vmatpush.bf16.msra.mxu0 %v239
  %301 = vmatpush.bf16.msra.mxu0 %v238
  %302 = vmatpush.bf16.msra.mxu0 %v237
  %303 = vmatpush.bf16.msra.mxu0 %v236
  %304 = vmatmul.bf16.gmra.mxu0 %v280
  %v305 = vpop.f32.mrf.mxu0
  %v306 = vadd.f32 %v246, %v305
  %v307 = vpop.f32.mrf.mxu0
  %v308 = vadd.f32 %v246, %v307
  %309 = vmatmul.bf16.gmra.mxu0 %v281
  %v310 = vpop.f32.mrf.mxu0
  %v311 = vadd.f32 %v246, %v310
  %v312 = vpop.f32.mrf.mxu0
  %v313 = vadd.f32 %v246, %v312
  %314 = vmatmul.bf16.gmra.mxu0 %v282
  %v315 = vpop.f32.mrf.mxu0
  %v316 = vadd.f32 %v246, %v315
  %v317 = vpop.f32.mrf.mxu0
  %v318 = vadd.f32 %v246, %v317
  %319 = vmatmul.bf16.gmra.mxu0 %v283
  %v320 = vpop.f32.mrf.mxu0
  %v321 = vadd.f32 %v246, %v320
  %v322 = vpop.f32.mrf.mxu0
  %v323 = vadd.f32 %v246, %v322
  %324 = vmatmul.bf16.gmra.mxu0 %v284
  %v325 = vpop.f32.mrf.mxu0
  %v326 = vadd.f32 %v246, %v325
  %v327 = vpop.f32.mrf.mxu0
  %v328 = vadd.f32 %v246, %v327
  %329 = vmatmul.bf16.gmra.mxu0 %v285
  %v330 = vpop.f32.mrf.mxu0
  %v331 = vadd.f32 %v246, %v330
  %v332 = vpop.f32.mrf.mxu0
  %v333 = vadd.f32 %v246, %v332
  %334 = vmatmul.bf16.gmra.mxu0 %v286
  %v335 = vpop.f32.mrf.mxu0
  %v336 = vadd.f32 %v246, %v335
  %v337 = vpop.f32.mrf.mxu0
  %v338 = vadd.f32 %v246, %v337
  %339 = vmatmul.bf16.gmra.mxu0 %v287
  %v340 = vpop.f32.mrf.mxu0
  %v341 = vadd.f32 %v246, %v340
  %v342 = vpop.f32.mrf.mxu0
  %v343 = vadd.f32 %v246, %v342
  %344 = vdwg.mxu0
  %v345 = vmax.f32 %v306, 0.0
  %v346 = vmax.f32 %v308, 0.0
  %v347 = vmax.f32 %v311, 0.0
  %v348 = vmax.f32 %v313, 0.0
  %v349 = vmax.f32 %v316, 0.0
  %v350 = vmax.f32 %v318, 0.0
  %v351 = vmax.f32 %v321, 0.0
  %v352 = vmax.f32 %v323, 0.0
  %v353 = vmax.f32 %v326, 0.0
  %v354 = vmax.f32 %v328, 0.0
  %v355 = vmax.f32 %v331, 0.0
  %v356 = vmax.f32 %v333, 0.0
  %v357 = vmax.f32 %v336, 0.0
  %v358 = vmax.f32 %v338, 0.0
  %v359 = vmax.f32 %v341, 0.0
  %v360 = vmax.f32 %v343, 0.0
  %v361 = vpack.c.bf16 %v346, %v345
  %v362 = vpack.c.bf16 %v348, %v347
  %v363 = vpack.c.bf16 %v350, %v349
  %v364 = vpack.c.bf16 %v352, %v351
  %v365 = vpack.c.bf16 %v354, %v353
  %v366 = vpack.c.bf16 %v356, %v355
  %v367 = vpack.c.bf16 %v358, %v357
  %v368 = vpack.c.bf16 %v360, %v359
  %v369 = vld [vmem:[%s4] sm:$0xf]
  %v370 = vld [vmem:[%s4 + $0x4] sm:$0xf]
  %v371 = vld [vmem:[%s4 + $0x8] sm:$0xf]
  %v372 = vld [vmem:[%s4 + $0xc] sm:$0xf]
  %v373 = vld [vmem:[%s4 + $0x10] sm:$0xf]
  %v374 = vld [vmem:[%s4 + $0x14] sm:$0xf]
  %v375 = vld [vmem:[%s4 + $0x18] sm:$0xf]
  %v376 = vld [vmem:[%s4 + $0x1c] sm:$0xf]
  %v377 = vld [vmem:[%s4 + $0x20] sm:$0xf]
  %v378 = vld [vmem:[%s4 + $0x24] sm:$0xf]
  %v379 = vld [vmem:[%s4 + $0x28] sm:$0xf]
  %v380 = vld [vmem:[%s4 + $0x2c] sm:$0xf]
  %v381 = vld [vmem:[%s4 + $0x30] sm:$0xf]
  %v382 = vld [vmem:[%s4 + $0x34] sm:$0xf]
  %v383 = vld [vmem:[%s4 + $0x38] sm:$0xf]
  %v384 = vld [vmem:[%s4 + $0x3c] sm:$0xf]
  %v401 = vunpack.c.l.b16 %v369
  %v402 = vunpack.c.l.b16 %v370
  %v403 = vunpack.c.l.b16 %v371
  %v404 = vunpack.c.l.b16 %v372
  %v405 = vunpack.c.l.b16 %v373
  %v406 = vunpack.c.l.b16 %v374
  %v407 = vunpack.c.l.b16 %v375
  %v408 = vunpack.c.l.b16 %v376
  %v409 = vunpack.c.l.b16 %v377
  %v410 = vunpack.c.l.b16 %v378
  %v411 = vunpack.c.l.b16 %v379
  %v412 = vunpack.c.l.b16 %v380
  %v413 = vunpack.c.l.b16 %v381
  %v414 = vunpack.c.l.b16 %v382
  %v415 = vunpack.c.l.b16 %v383
  %v416 = vunpack.c.l.b16 %v384
  %v417 = vpack.c.b16 %v402, %v401
  %v418 = vpack.c.b16 %v404, %v403
  %v419 = vpack.c.b16 %v406, %v405
  %v420 = vpack.c.b16 %v408, %v407
  %v421 = vpack.c.b16 %v410, %v409
  %v422 = vpack.c.b16 %v412, %v411
  %v423 = vpack.c.b16 %v414, %v413
  %v424 = vpack.c.b16 %v416, %v415
  %433 = vmatpush.bf16.msra.mxu0 %v424
  %434 = vmatpush.bf16.msra.mxu0 %v423
  %435 = vmatpush.bf16.msra.mxu0 %v422
  %436 = vmatpush.bf16.msra.mxu0 %v421
  %437 = vmatpush.bf16.msra.mxu0 %v420
  %438 = vmatpush.bf16.msra.mxu0 %v419
  %439 = vmatpush.bf16.msra.mxu0 %v418
  %440 = vmatpush.bf16.msra.mxu0 %v417
  %441 = vmatmul.bf16.gmra.mxu0 %v361
  %v442 = vpop.f32.mrf.mxu0
  %v443 = vadd.f32 0.0, %v442
  %v444 = vpop.f32.mrf.mxu0
  %v445 = vadd.f32 0.0, %v444
  %446 = vmatmul.bf16.gmra.mxu0 %v362
  %v447 = vpop.f32.mrf.mxu0
  %v448 = vadd.f32 0.0, %v447
  %v449 = vpop.f32.mrf.mxu0
  %v450 = vadd.f32 0.0, %v449
  %451 = vmatmul.bf16.gmra.mxu0 %v363
  %v452 = vpop.f32.mrf.mxu0
  %v453 = vadd.f32 0.0, %v452
  %v454 = vpop.f32.mrf.mxu0
  %v455 = vadd.f32 0.0, %v454
  %456 = vmatmul.bf16.gmra.mxu0 %v364
  %v457 = vpop.f32.mrf.mxu0
  %v458 = vadd.f32 0.0, %v457
  %v459 = vpop.f32.mrf.mxu0
  %v460 = vadd.f32 0.0, %v459
  %461 = vmatmul.bf16.gmra.mxu0 %v365
  %v462 = vpop.f32.mrf.mxu0
  %v463 = vadd.f32 0.0, %v462
  %v464 = vpop.f32.mrf.mxu0
  %v465 = vadd.f32 0.0, %v464
  %466 = vmatmul.bf16.gmra.mxu0 %v366
  %v467 = vpop.f32.mrf.mxu0
  %v468 = vadd.f32 0.0, %v467
  %v469 = vpop.f32.mrf.mxu0
  %v470 = vadd.f32 0.0, %v469
  %471 = vmatmul.bf16.gmra.mxu0 %v367
  %v472 = vpop.f32.mrf.mxu0
  %v473 = vadd.f32 0.0, %v472
  %v474 = vpop.f32.mrf.mxu0
  %v475 = vadd.f32 0.0, %v474
  %476 = vmatmul.bf16.gmra.mxu0 %v368
  %v477 = vpop.f32.mrf.mxu0
  %v478 = vadd.f32 0.0, %v477
  %v479 = vpop.f32.mrf.mxu0
  %v480 = vadd.f32 0.0, %v479
  %481 = vdwg.mxu0
  %v482 = vpack.c.bf16 %v445, %v443
  %v483 = vpack.c.bf16 %v450, %v448
  %v484 = vpack.c.bf16 %v455, %v453
  %v485 = vpack.c.bf16 %v460, %v458
  %v486 = vpack.c.bf16 %v465, %v463
  %v487 = vpack.c.bf16 %v470, %v468
  %v488 = vpack.c.bf16 %v475, %v473
  %v489 = vpack.c.bf16 %v480, %v478
  %v490 = vld [vmem:[%s5] sm:$0x1]
  %v492 = vperm.slane %v490, 0
  %494 = vmatpush.bf16.msra.mxu0 %v489
  %495 = vmatpush.bf16.msra.mxu0 %v488
  %496 = vmatpush.bf16.msra.mxu0 %v487
  %497 = vmatpush.bf16.msra.mxu0 %v486
  %498 = vmatpush.bf16.msra.mxu0 %v485
  %499 = vmatpush.bf16.msra.mxu0 %v484
  %500 = vmatpush.bf16.msra.mxu0 %v483
  %501 = vmatpush.bf16.msra.mxu0 %v482
  %502 = vmatmul.bf16.gmra.mxu0 %v280
  %v503 = vpop.f32.mrf.mxu0
  %v504 = vadd.f32 %v492, %v503
  %v505 = vpop.f32.mrf.mxu0
  %v506 = vadd.f32 %v492, %v505
  %507 = vmatmul.bf16.gmra.mxu0 %v281
  %v508 = vpop.f32.mrf.mxu0
  %v509 = vadd.f32 %v492, %v508
  %v510 = vpop.f32.mrf.mxu0
  %v511 = vadd.f32 %v492, %v510
  %512 = vmatmul.bf16.gmra.mxu0 %v282
  %v513 = vpop.f32.mrf.mxu0
  %v514 = vadd.f32 %v492, %v513
  %v515 = vpop.f32.mrf.mxu0
  %v516 = vadd.f32 %v492, %v515
  %517 = vmatmul.bf16.gmra.mxu0 %v283
  %v518 = vpop.f32.mrf.mxu0
  %v519 = vadd.f32 %v492, %v518
  %v520 = vpop.f32.mrf.mxu0
  %v521 = vadd.f32 %v492, %v520
  %522 = vmatmul.bf16.gmra.mxu0 %v284
  %v523 = vpop.f32.mrf.mxu0
  %v524 = vadd.f32 %v492, %v523
  %v525 = vpop.f32.mrf.mxu0
  %v526 = vadd.f32 %v492, %v525
  %527 = vmatmul.bf16.gmra.mxu0 %v285
  %v528 = vpop.f32.mrf.mxu0
  %v529 = vadd.f32 %v492, %v528
  %v530 = vpop.f32.mrf.mxu0
  %v531 = vadd.f32 %v492, %v530
  %532 = vmatmul.bf16.gmra.mxu0 %v286
  %v533 = vpop.f32.mrf.mxu0
  %v534 = vadd.f32 %v492, %v533
  %v535 = vpop.f32.mrf.mxu0
  %v536 = vadd.f32 %v492, %v535
  %537 = vmatmul.bf16.gmra.mxu0 %v287
  %v538 = vpop.f32.mrf.mxu0
  %v539 = vadd.f32 %v492, %v538
  %v540 = vpop.f32.mrf.mxu0
  %v541 = vadd.f32 %v492, %v540
  %542 = vdwg.mxu0
  %v543 = vmax.f32 %v504, 0.0
  %v544 = vmax.f32 %v506, 0.0
  %v545 = vmax.f32 %v509, 0.0
  %v546 = vmax.f32 %v511, 0.0
  %v547 = vmax.f32 %v514, 0.0
  %v548 = vmax.f32 %v516, 0.0
  %v549 = vmax.f32 %v519, 0.0
  %v550 = vmax.f32 %v521, 0.0
  %v551 = vmax.f32 %v524, 0.0
  %v552 = vmax.f32 %v526, 0.0
  %v553 = vmax.f32 %v529, 0.0
  %v554 = vmax.f32 %v531, 0.0
  %v555 = vmax.f32 %v534, 0.0
  %v556 = vmax.f32 %v536, 0.0
  %v557 = vmax.f32 %v539, 0.0
  %v558 = vmax.f32 %v541, 0.0
  %v559 = vpack.c.bf16 %v544, %v543
  %v560 = vpack.c.bf16 %v546, %v545
  %v561 = vpack.c.bf16 %v548, %v547
  %v562 = vpack.c.bf16 %v550, %v549
  %v563 = vpack.c.bf16 %v552, %v551
  %v564 = vpack.c.bf16 %v554, %v553
  %v565 = vpack.c.bf16 %v556, %v555
  %v566 = vpack.c.bf16 %v558, %v557
  %v567 = vld [vmem:[%s6] sm:$0xf]
  %v568 = vld [vmem:[%s6 + $0x4] sm:$0xf]
  %v569 = vld [vmem:[%s6 + $0x8] sm:$0xf]
  %v570 = vld [vmem:[%s6 + $0xc] sm:$0xf]
  %v571 = vld [vmem:[%s6 + $0x10] sm:$0xf]
  %v572 = vld [vmem:[%s6 + $0x14] sm:$0xf]
  %v573 = vld [vmem:[%s6 + $0x18] sm:$0xf]
  %v574 = vld [vmem:[%s6 + $0x1c] sm:$0xf]
  %v575 = vld [vmem:[%s6 + $0x20] sm:$0xf]
  %v576 = vld [vmem:[%s6 + $0x24] sm:$0xf]
  %v577 = vld [vmem:[%s6 + $0x28] sm:$0xf]
  %v578 = vld [vmem:[%s6 + $0x2c] sm:$0xf]
  %v579 = vld [vmem:[%s6 + $0x30] sm:$0xf]
  %v580 = vld [vmem:[%s6 + $0x34] sm:$0xf]
  %v581 = vld [vmem:[%s6 + $0x38] sm:$0xf]
  %v582 = vld [vmem:[%s6 + $0x3c] sm:$0xf]
  %v599 = vunpack.c.l.b16 %v567
  %v600 = vunpack.c.l.b16 %v568
  %v601 = vunpack.c.l.b16 %v569
  %v602 = vunpack.c.l.b16 %v570
  %v603 = vunpack.c.l.b16 %v571
  %v604 = vunpack.c.l.b16 %v572
  %v605 = vunpack.c.l.b16 %v573
  %v606 = vunpack.c.l.b16 %v574
  %v607 = vunpack.c.l.b16 %v575
  %v608 = vunpack.c.l.b16 %v576
  %v609 = vunpack.c.l.b16 %v577
  %v610 = vunpack.c.l.b16 %v578
  %v611 = vunpack.c.l.b16 %v579
  %v612 = vunpack.c.l.b16 %v580
  %v613 = vunpack.c.l.b16 %v581
  %v614 = vunpack.c.l.b16 %v582
  %v615 = vpack.c.b16 %v600, %v599
  %v616 = vpack.c.b16 %v602, %v601
  %v617 = vpack.c.b16 %v604, %v603
  %v618 = vpack.c.b16 %v606, %v605
  %v619 = vpack.c.b16 %v608, %v607
  %v620 = vpack.c.b16 %v610, %v609
  %v621 = vpack.c.b16 %v612, %v611
  %v622 = vpack.c.b16 %v614, %v613
  %631 = vmatpush.bf16.msra.mxu0 %v622
  %632 = vmatpush.bf16.msra.mxu0 %v621
  %633 = vmatpush.bf16.msra.mxu0 %v620
  %634 = vmatpush.bf16.msra.mxu0 %v619
  %635 = vmatpush.bf16.msra.mxu0 %v618
  %636 = vmatpush.bf16.msra.mxu0 %v617
  %637 = vmatpush.bf16.msra.mxu0 %v616
  %638 = vmatpush.bf16.msra.mxu0 %v615
  %639 = vmatmul.bf16.gmra.mxu0 %v559
  %v640 = vpop.f32.mrf.mxu0
  %v641 = vadd.f32 0.0, %v640
  %v642 = vpop.f32.mrf.mxu0
  %v643 = vadd.f32 0.0, %v642
  %644 = vmatmul.bf16.gmra.mxu0 %v560
  %v645 = vpop.f32.mrf.mxu0
  %v646 = vadd.f32 0.0, %v645
  %v647 = vpop.f32.mrf.mxu0
  %v648 = vadd.f32 0.0, %v647
  %649 = vmatmul.bf16.gmra.mxu0 %v561
  %v650 = vpop.f32.mrf.mxu0
  %v651 = vadd.f32 0.0, %v650
  %v652 = vpop.f32.mrf.mxu0
  %v653 = vadd.f32 0.0, %v652
  %654 = vmatmul.bf16.gmra.mxu0 %v562
  %v655 = vpop.f32.mrf.mxu0
  %v656 = vadd.f32 0.0, %v655
  %v657 = vpop.f32.mrf.mxu0
  %v658 = vadd.f32 0.0, %v657
  %659 = vmatmul.bf16.gmra.mxu0 %v563
  %v660 = vpop.f32.mrf.mxu0
  %v661 = vadd.f32 0.0, %v660
  %v662 = vpop.f32.mrf.mxu0
  %v663 = vadd.f32 0.0, %v662
  %664 = vmatmul.bf16.gmra.mxu0 %v564
  %v665 = vpop.f32.mrf.mxu0
  %v666 = vadd.f32 0.0, %v665
  %v667 = vpop.f32.mrf.mxu0
  %v668 = vadd.f32 0.0, %v667
  %669 = vmatmul.bf16.gmra.mxu0 %v565
  %v670 = vpop.f32.mrf.mxu0
  %v671 = vadd.f32 0.0, %v670
  %v672 = vpop.f32.mrf.mxu0
  %v673 = vadd.f32 0.0, %v672
  %674 = vmatmul.bf16.gmra.mxu0 %v566
  %v675 = vpop.f32.mrf.mxu0
  %v676 = vadd.f32 0.0, %v675
  %v677 = vpop.f32.mrf.mxu0
  %v678 = vadd.f32 0.0, %v677
  %679 = vdwg.mxu0
  %v680 = vpack.c.bf16 %v643, %v641
  %v681 = vpack.c.bf16 %v648, %v646
  %v682 = vpack.c.bf16 %v653, %v651
  %v683 = vpack.c.bf16 %v658, %v656
  %v684 = vpack.c.bf16 %v663, %v661
  %v685 = vpack.c.bf16 %v668, %v666
  %v686 = vpack.c.bf16 %v673, %v671
  %v687 = vpack.c.bf16 %v678, %v676
  %v688 = vld [vmem:[%s7] sm:$0x1]
  %v690 = vperm.slane %v688, 0
  %692 = vmatpush.bf16.msra.mxu0 %v687
  %693 = vmatpush.bf16.msra.mxu0 %v686
  %694 = vmatpush.bf16.msra.mxu0 %v685
  %695 = vmatpush.bf16.msra.mxu0 %v684
  %696 = vmatpush.bf16.msra.mxu0 %v683
  %697 = vmatpush.bf16.msra.mxu0 %v682
  %698 = vmatpush.bf16.msra.mxu0 %v681
  %699 = vmatpush.bf16.msra.mxu0 %v680
  %700 = vmatmul.bf16.gmra.mxu0 %v280
  %v701 = vpop.f32.mrf.mxu0
  %v702 = vadd.f32 %v690, %v701
  %v703 = vpop.f32.mrf.mxu0
  %v704 = vadd.f32 %v690, %v703
  %705 = vmatmul.bf16.gmra.mxu0 %v281
  %v706 = vpop.f32.mrf.mxu0
  %v707 = vadd.f32 %v690, %v706
  %v708 = vpop.f32.mrf.mxu0
  %v709 = vadd.f32 %v690, %v708
  %710 = vmatmul.bf16.gmra.mxu0 %v282
  %v711 = vpop.f32.mrf.mxu0
  %v712 = vadd.f32 %v690, %v711
  %v713 = vpop.f32.mrf.mxu0
  %v714 = vadd.f32 %v690, %v713
  %715 = vmatmul.bf16.gmra.mxu0 %v283
  %v716 = vpop.f32.mrf.mxu0
  %v717 = vadd.f32 %v690, %v716
  %v718 = vpop.f32.mrf.mxu0
  %v719 = vadd.f32 %v690, %v718
  %720 = vmatmul.bf16.gmra.mxu0 %v284
  %v721 = vpop.f32.mrf.mxu0
  %v722 = vadd.f32 %v690, %v721
  %v723 = vpop.f32.mrf.mxu0
  %v724 = vadd.f32 %v690, %v723
  %725 = vmatmul.bf16.gmra.mxu0 %v285
  %v726 = vpop.f32.mrf.mxu0
  %v727 = vadd.f32 %v690, %v726
  %v728 = vpop.f32.mrf.mxu0
  %v729 = vadd.f32 %v690, %v728
  %730 = vmatmul.bf16.gmra.mxu0 %v286
  %v731 = vpop.f32.mrf.mxu0
  %v732 = vadd.f32 %v690, %v731
  %v733 = vpop.f32.mrf.mxu0
  %v734 = vadd.f32 %v690, %v733
  %735 = vmatmul.bf16.gmra.mxu0 %v287
  %v736 = vpop.f32.mrf.mxu0
  %v737 = vadd.f32 %v690, %v736
  %v738 = vpop.f32.mrf.mxu0
  %v739 = vadd.f32 %v690, %v738
  %740 = vdwg.mxu0
  %v741 = vmax.f32 %v702, 0.0
  %v742 = vmax.f32 %v704, 0.0
  %v743 = vmax.f32 %v707, 0.0
  %v744 = vmax.f32 %v709, 0.0
  %v745 = vmax.f32 %v712, 0.0
  %v746 = vmax.f32 %v714, 0.0
  %v747 = vmax.f32 %v717, 0.0
  %v748 = vmax.f32 %v719, 0.0
  %v749 = vmax.f32 %v722, 0.0
  %v750 = vmax.f32 %v724, 0.0
  %v751 = vmax.f32 %v727, 0.0
  %v752 = vmax.f32 %v729, 0.0
  %v753 = vmax.f32 %v732, 0.0
  %v754 = vmax.f32 %v734, 0.0
  %v755 = vmax.f32 %v737, 0.0
  %v756 = vmax.f32 %v739, 0.0
  %v757 = vpack.c.bf16 %v742, %v741
  %v758 = vpack.c.bf16 %v744, %v743
  %v759 = vpack.c.bf16 %v746, %v745
  %v760 = vpack.c.bf16 %v748, %v747
  %v761 = vpack.c.bf16 %v750, %v749
  %v762 = vpack.c.bf16 %v752, %v751
  %v763 = vpack.c.bf16 %v754, %v753
  %v764 = vpack.c.bf16 %v756, %v755
  %v765 = vld [vmem:[%s8] sm:$0xf]
  %v766 = vld [vmem:[%s8 + $0x4] sm:$0xf]
  %v767 = vld [vmem:[%s8 + $0x8] sm:$0xf]
  %v768 = vld [vmem:[%s8 + $0xc] sm:$0xf]
  %v769 = vld [vmem:[%s8 + $0x10] sm:$0xf]
  %v770 = vld [vmem:[%s8 + $0x14] sm:$0xf]
  %v771 = vld [vmem:[%s8 + $0x18] sm:$0xf]
  %v772 = vld [vmem:[%s8 + $0x1c] sm:$0xf]
  %v773 = vld [vmem:[%s8 + $0x20] sm:$0xf]
  %v774 = vld [vmem:[%s8 + $0x24] sm:$0xf]
  %v775 = vld [vmem:[%s8 + $0x28] sm:$0xf]
  %v776 = vld [vmem:[%s8 + $0x2c] sm:$0xf]
  %v777 = vld [vmem:[%s8 + $0x30] sm:$0xf]
  %v778 = vld [vmem:[%s8 + $0x34] sm:$0xf]
  %v779 = vld [vmem:[%s8 + $0x38] sm:$0xf]
  %v780 = vld [vmem:[%s8 + $0x3c] sm:$0xf]
  %v797 = vunpack.c.l.b16 %v765
  %v798 = vunpack.c.l.b16 %v766
  %v799 = vunpack.c.l.b16 %v767
  %v800 = vunpack.c.l.b16 %v768
  %v801 = vunpack.c.l.b16 %v769
  %v802 = vunpack.c.l.b16 %v770
  %v803 = vunpack.c.l.b16 %v771
  %v804 = vunpack.c.l.b16 %v772
  %v805 = vunpack.c.l.b16 %v773
  %v806 = vunpack.c.l.b16 %v774
  %v807 = vunpack.c.l.b16 %v775
  %v808 = vunpack.c.l.b16 %v776
  %v809 = vunpack.c.l.b16 %v777
  %v810 = vunpack.c.l.b16 %v778
  %v811 = vunpack.c.l.b16 %v779
  %v812 = vunpack.c.l.b16 %v780
  %v813 = vpack.c.b16 %v798, %v797
  %v814 = vpack.c.b16 %v800, %v799
  %v815 = vpack.c.b16 %v802, %v801
  %v816 = vpack.c.b16 %v804, %v803
  %v817 = vpack.c.b16 %v806, %v805
  %v818 = vpack.c.b16 %v808, %v807
  %v819 = vpack.c.b16 %v810, %v809
  %v820 = vpack.c.b16 %v812, %v811
  %829 = vmatpush.bf16.msra.mxu0 %v820
  %830 = vmatpush.bf16.msra.mxu0 %v819
  %831 = vmatpush.bf16.msra.mxu0 %v818
  %832 = vmatpush.bf16.msra.mxu0 %v817
  %833 = vmatpush.bf16.msra.mxu0 %v816
  %834 = vmatpush.bf16.msra.mxu0 %v815
  %835 = vmatpush.bf16.msra.mxu0 %v814
  %836 = vmatpush.bf16.msra.mxu0 %v813
  %837 = vmatmul.bf16.gmra.mxu0 %v757
  %v838 = vpop.f32.mrf.mxu0
  %v839 = vadd.f32 0.0, %v838
  %v840 = vpop.f32.mrf.mxu0
  %v841 = vadd.f32 0.0, %v840
  %842 = vmatmul.bf16.gmra.mxu0 %v758
  %v843 = vpop.f32.mrf.mxu0
  %v844 = vadd.f32 0.0, %v843
  %v845 = vpop.f32.mrf.mxu0
  %v846 = vadd.f32 0.0, %v845
  %847 = vmatmul.bf16.gmra.mxu0 %v759
  %v848 = vpop.f32.mrf.mxu0
  %v849 = vadd.f32 0.0, %v848
  %v850 = vpop.f32.mrf.mxu0
  %v851 = vadd.f32 0.0, %v850
  %852 = vmatmul.bf16.gmra.mxu0 %v760
  %v853 = vpop.f32.mrf.mxu0
  %v854 = vadd.f32 0.0, %v853
  %v855 = vpop.f32.mrf.mxu0
  %v856 = vadd.f32 0.0, %v855
  %857 = vmatmul.bf16.gmra.mxu0 %v761
  %v858 = vpop.f32.mrf.mxu0
  %v859 = vadd.f32 0.0, %v858
  %v860 = vpop.f32.mrf.mxu0
  %v861 = vadd.f32 0.0, %v860
  %862 = vmatmul.bf16.gmra.mxu0 %v762
  %v863 = vpop.f32.mrf.mxu0
  %v864 = vadd.f32 0.0, %v863
  %v865 = vpop.f32.mrf.mxu0
  %v866 = vadd.f32 0.0, %v865
  %867 = vmatmul.bf16.gmra.mxu0 %v763
  %v868 = vpop.f32.mrf.mxu0
  %v869 = vadd.f32 0.0, %v868
  %v870 = vpop.f32.mrf.mxu0
  %v871 = vadd.f32 0.0, %v870
  %872 = vmatmul.bf16.gmra.mxu0 %v764
  %v873 = vpop.f32.mrf.mxu0
  %v874 = vadd.f32 0.0, %v873
  %v875 = vpop.f32.mrf.mxu0
  %v876 = vadd.f32 0.0, %v875
  %877 = vdwg.mxu0
  %v878 = vpack.c.bf16 %v841, %v839
  %v879 = vpack.c.bf16 %v846, %v844
  %v880 = vpack.c.bf16 %v851, %v849
  %v881 = vpack.c.bf16 %v856, %v854
  %v882 = vpack.c.bf16 %v861, %v859
  %v883 = vpack.c.bf16 %v866, %v864
  %v884 = vpack.c.bf16 %v871, %v869
  %v885 = vpack.c.bf16 %v876, %v874
  %v886 = vld [vmem:[%s9] sm:$0x1]
  %v888 = vperm.slane %v886, 0
  %890 = vmatpush.bf16.msra.mxu0 %v885
  %891 = vmatpush.bf16.msra.mxu0 %v884
  %892 = vmatpush.bf16.msra.mxu0 %v883
  %893 = vmatpush.bf16.msra.mxu0 %v882
  %894 = vmatpush.bf16.msra.mxu0 %v881
  %895 = vmatpush.bf16.msra.mxu0 %v880
  %896 = vmatpush.bf16.msra.mxu0 %v879
  %897 = vmatpush.bf16.msra.mxu0 %v878
  %898 = vmatmul.bf16.gmra.mxu0 %v280
  %v899 = vpop.f32.mrf.mxu0
  %v900 = vadd.f32 %v888, %v899
  %v901 = vpop.f32.mrf.mxu0
  %v902 = vadd.f32 %v888, %v901
  %903 = vmatmul.bf16.gmra.mxu0 %v281
  %v904 = vpop.f32.mrf.mxu0
  %v905 = vadd.f32 %v888, %v904
  %v906 = vpop.f32.mrf.mxu0
  %v907 = vadd.f32 %v888, %v906
  %908 = vmatmul.bf16.gmra.mxu0 %v282
  %v909 = vpop.f32.mrf.mxu0
  %v910 = vadd.f32 %v888, %v909
  %v911 = vpop.f32.mrf.mxu0
  %v912 = vadd.f32 %v888, %v911
  %913 = vmatmul.bf16.gmra.mxu0 %v283
  %v914 = vpop.f32.mrf.mxu0
  %v915 = vadd.f32 %v888, %v914
  %v916 = vpop.f32.mrf.mxu0
  %v917 = vadd.f32 %v888, %v916
  %918 = vmatmul.bf16.gmra.mxu0 %v284
  %v919 = vpop.f32.mrf.mxu0
  %v920 = vadd.f32 %v888, %v919
  %v921 = vpop.f32.mrf.mxu0
  %v922 = vadd.f32 %v888, %v921
  %923 = vmatmul.bf16.gmra.mxu0 %v285
  %v924 = vpop.f32.mrf.mxu0
  %v925 = vadd.f32 %v888, %v924
  %v926 = vpop.f32.mrf.mxu0
  %v927 = vadd.f32 %v888, %v926
  %928 = vmatmul.bf16.gmra.mxu0 %v286
  %v929 = vpop.f32.mrf.mxu0
  %v930 = vadd.f32 %v888, %v929
  %v931 = vpop.f32.mrf.mxu0
  %v932 = vadd.f32 %v888, %v931
  %933 = vmatmul.bf16.gmra.mxu0 %v287
  %v934 = vpop.f32.mrf.mxu0
  %v935 = vadd.f32 %v888, %v934
  %v936 = vpop.f32.mrf.mxu0
  %v937 = vadd.f32 %v888, %v936
  %938 = vdwg.mxu0
  %939 = vst [vmem:[%s12] sm:$0xff] %v900
  %940 = vst [vmem:[%s12 + $0x8] sm:$0xff] %v902
  %941 = vst [vmem:[%s12 + $0x10] sm:$0xff] %v905
  %942 = vst [vmem:[%s12 + $0x18] sm:$0xff] %v907
  %943 = vst [vmem:[%s12 + $0x20] sm:$0xff] %v910
  %944 = vst [vmem:[%s12 + $0x28] sm:$0xff] %v912
  %945 = vst [vmem:[%s12 + $0x30] sm:$0xff] %v915
  %946 = vst [vmem:[%s12 + $0x38] sm:$0xff] %v917
  %947 = vst [vmem:[%s12 + $0x40] sm:$0xff] %v920
  %948 = vst [vmem:[%s12 + $0x48] sm:$0xff] %v922
  %949 = vst [vmem:[%s12 + $0x50] sm:$0xff] %v925
  %950 = vst [vmem:[%s12 + $0x58] sm:$0xff] %v927
  %951 = vst [vmem:[%s12 + $0x60] sm:$0xff] %v930
  %952 = vst [vmem:[%s12 + $0x68] sm:$0xff] %v932
  %953 = vst [vmem:[%s12 + $0x70] sm:$0xff] %v935
  %954 = vst [vmem:[%s12 + $0x78] sm:$0xff] %v937
  %v955 = vld [vmem:[%s10] sm:$0xf]
  %v956 = vld [vmem:[%s10 + $0x4] sm:$0xf]
  %v957 = vld [vmem:[%s10 + $0x8] sm:$0xf]
  %v958 = vld [vmem:[%s10 + $0xc] sm:$0xf]
  %v959 = vld [vmem:[%s10 + $0x10] sm:$0xf]
  %v960 = vld [vmem:[%s10 + $0x14] sm:$0xf]
  %v961 = vld [vmem:[%s10 + $0x18] sm:$0xf]
  %v962 = vld [vmem:[%s10 + $0x1c] sm:$0xf]
  %v963 = vld [vmem:[%s10 + $0x20] sm:$0xf]
  %v964 = vld [vmem:[%s10 + $0x24] sm:$0xf]
  %v965 = vld [vmem:[%s10 + $0x28] sm:$0xf]
  %v966 = vld [vmem:[%s10 + $0x2c] sm:$0xf]
  %v967 = vld [vmem:[%s10 + $0x30] sm:$0xf]
  %v968 = vld [vmem:[%s10 + $0x34] sm:$0xf]
  %v969 = vld [vmem:[%s10 + $0x38] sm:$0xf]
  %v970 = vld [vmem:[%s10 + $0x3c] sm:$0xf]
  %v987 = vunpack.c.l.b16 %v955
  %v988 = vunpack.c.l.b16 %v956
  %v989 = vunpack.c.l.b16 %v957
  %v990 = vunpack.c.l.b16 %v958
  %v991 = vunpack.c.l.b16 %v959
  %v992 = vunpack.c.l.b16 %v960
  %v993 = vunpack.c.l.b16 %v961
  %v994 = vunpack.c.l.b16 %v962
  %v995 = vunpack.c.l.b16 %v963
  %v996 = vunpack.c.l.b16 %v964
  %v997 = vunpack.c.l.b16 %v965
  %v998 = vunpack.c.l.b16 %v966
  %v999 = vunpack.c.l.b16 %v967
  %v1000 = vunpack.c.l.b16 %v968
  %v1001 = vunpack.c.l.b16 %v969
  %v1002 = vunpack.c.l.b16 %v970
  %v1003 = vpack.c.b16 %v988, %v987
  %v1004 = vpack.c.b16 %v990, %v989
  %v1005 = vpack.c.b16 %v992, %v991
  %v1006 = vpack.c.b16 %v994, %v993
  %v1007 = vpack.c.b16 %v996, %v995
  %v1008 = vpack.c.b16 %v998, %v997
  %v1009 = vpack.c.b16 %v1000, %v999
  %v1010 = vpack.c.b16 %v1002, %v1001
  %1019 = vmatpush.bf16.msra.mxu0 %v1010
  %1020 = vmatpush.bf16.msra.mxu0 %v1009
  %1021 = vmatpush.bf16.msra.mxu0 %v1008
  %1022 = vmatpush.bf16.msra.mxu0 %v1007
  %1023 = vmatpush.bf16.msra.mxu0 %v1006
  %1024 = vmatpush.bf16.msra.mxu0 %v1005
  %1025 = vmatpush.bf16.msra.mxu0 %v1004
  %1026 = vmatpush.bf16.msra.mxu0 %v1003
  %1027 = vmatmul.bf16.gmra.mxu0 %v559
  %v1028 = vpop.f32.mrf.mxu0
  %v1029 = vadd.f32 0.0, %v1028
  %v1030 = vpop.f32.mrf.mxu0
  %v1031 = vadd.f32 0.0, %v1030
  %1032 = vmatmul.bf16.gmra.mxu0 %v560
  %v1033 = vpop.f32.mrf.mxu0
  %v1034 = vadd.f32 0.0, %v1033
  %v1035 = vpop.f32.mrf.mxu0
  %v1036 = vadd.f32 0.0, %v1035
  %1037 = vmatmul.bf16.gmra.mxu0 %v561
  %v1038 = vpop.f32.mrf.mxu0
  %v1039 = vadd.f32 0.0, %v1038
  %v1040 = vpop.f32.mrf.mxu0
  %v1041 = vadd.f32 0.0, %v1040
  %1042 = vmatmul.bf16.gmra.mxu0 %v562
  %v1043 = vpop.f32.mrf.mxu0
  %v1044 = vadd.f32 0.0, %v1043
  %v1045 = vpop.f32.mrf.mxu0
  %v1046 = vadd.f32 0.0, %v1045
  %1047 = vmatmul.bf16.gmra.mxu0 %v563
  %v1048 = vpop.f32.mrf.mxu0
  %v1049 = vadd.f32 0.0, %v1048
  %v1050 = vpop.f32.mrf.mxu0
  %v1051 = vadd.f32 0.0, %v1050
  %1052 = vmatmul.bf16.gmra.mxu0 %v564
  %v1053 = vpop.f32.mrf.mxu0
  %v1054 = vadd.f32 0.0, %v1053
  %v1055 = vpop.f32.mrf.mxu0
  %v1056 = vadd.f32 0.0, %v1055
  %1057 = vmatmul.bf16.gmra.mxu0 %v565
  %v1058 = vpop.f32.mrf.mxu0
  %v1059 = vadd.f32 0.0, %v1058
  %v1060 = vpop.f32.mrf.mxu0
  %v1061 = vadd.f32 0.0, %v1060
  %1062 = vmatmul.bf16.gmra.mxu0 %v566
  %v1063 = vpop.f32.mrf.mxu0
  %v1064 = vadd.f32 0.0, %v1063
  %v1065 = vpop.f32.mrf.mxu0
  %v1066 = vadd.f32 0.0, %v1065
  %1067 = vdwg.mxu0
  %v1068 = vpack.c.bf16 %v1031, %v1029
  %v1069 = vpack.c.bf16 %v1036, %v1034
  %v1070 = vpack.c.bf16 %v1041, %v1039
  %v1071 = vpack.c.bf16 %v1046, %v1044
  %v1072 = vpack.c.bf16 %v1051, %v1049
  %v1073 = vpack.c.bf16 %v1056, %v1054
  %v1074 = vpack.c.bf16 %v1061, %v1059
  %v1075 = vpack.c.bf16 %v1066, %v1064
  %v1076 = vld [vmem:[%s11] sm:$0x1]
  %v1078 = vperm.slane %v1076, 0
  %1080 = vmatpush.bf16.msra.mxu0 %v1075
  %1081 = vmatpush.bf16.msra.mxu0 %v1074
  %1082 = vmatpush.bf16.msra.mxu0 %v1073
  %1083 = vmatpush.bf16.msra.mxu0 %v1072
  %1084 = vmatpush.bf16.msra.mxu0 %v1071
  %1085 = vmatpush.bf16.msra.mxu0 %v1070
  %1086 = vmatpush.bf16.msra.mxu0 %v1069
  %1087 = vmatpush.bf16.msra.mxu0 %v1068
  %1088 = vmatmul.bf16.gmra.mxu0 %v280
  %v1089 = vpop.f32.mrf.mxu0
  %v1090 = vadd.f32 %v1078, %v1089
  %v1091 = vpop.f32.mrf.mxu0
  %v1092 = vadd.f32 %v1078, %v1091
  %1093 = vmatmul.bf16.gmra.mxu0 %v281
  %v1094 = vpop.f32.mrf.mxu0
  %v1095 = vadd.f32 %v1078, %v1094
  %v1096 = vpop.f32.mrf.mxu0
  %v1097 = vadd.f32 %v1078, %v1096
  %1098 = vmatmul.bf16.gmra.mxu0 %v282
  %v1099 = vpop.f32.mrf.mxu0
  %v1100 = vadd.f32 %v1078, %v1099
  %v1101 = vpop.f32.mrf.mxu0
  %v1102 = vadd.f32 %v1078, %v1101
  %1103 = vmatmul.bf16.gmra.mxu0 %v283
  %v1104 = vpop.f32.mrf.mxu0
  %v1105 = vadd.f32 %v1078, %v1104
  %v1106 = vpop.f32.mrf.mxu0
  %v1107 = vadd.f32 %v1078, %v1106
  %1108 = vmatmul.bf16.gmra.mxu0 %v284
  %v1109 = vpop.f32.mrf.mxu0
  %v1110 = vadd.f32 %v1078, %v1109
  %v1111 = vpop.f32.mrf.mxu0
  %v1112 = vadd.f32 %v1078, %v1111
  %1113 = vmatmul.bf16.gmra.mxu0 %v285
  %v1114 = vpop.f32.mrf.mxu0
  %v1115 = vadd.f32 %v1078, %v1114
  %v1116 = vpop.f32.mrf.mxu0
  %v1117 = vadd.f32 %v1078, %v1116
  %1118 = vmatmul.bf16.gmra.mxu0 %v286
  %v1119 = vpop.f32.mrf.mxu0
  %v1120 = vadd.f32 %v1078, %v1119
  %v1121 = vpop.f32.mrf.mxu0
  %v1122 = vadd.f32 %v1078, %v1121
  %1123 = vmatmul.bf16.gmra.mxu0 %v287
  %v1124 = vpop.f32.mrf.mxu0
  %v1125 = vadd.f32 %v1078, %v1124
  %v1126 = vpop.f32.mrf.mxu0
  %v1127 = vadd.f32 %v1078, %v1126
  %1128 = vdwg.mxu0
  %v1129 = vmax.f32 %v1090, 0.0
  %v1130 = vmax.f32 %v1092, 0.0
  %v1131 = vmax.f32 %v1095, 0.0
  %v1132 = vmax.f32 %v1097, 0.0
  %v1133 = vmax.f32 %v1100, 0.0
  %v1134 = vmax.f32 %v1102, 0.0
  %v1135 = vmax.f32 %v1105, 0.0
  %v1136 = vmax.f32 %v1107, 0.0
  %v1137 = vmax.f32 %v1110, 0.0
  %v1138 = vmax.f32 %v1112, 0.0
  %v1139 = vmax.f32 %v1115, 0.0
  %v1140 = vmax.f32 %v1117, 0.0
  %v1141 = vmax.f32 %v1120, 0.0
  %v1142 = vmax.f32 %v1122, 0.0
  %v1143 = vmax.f32 %v1125, 0.0
  %v1144 = vmax.f32 %v1127, 0.0
  %v1145 = vpack.c.bf16 %v1130, %v1129
  %v1146 = vpack.c.bf16 %v1132, %v1131
  %v1147 = vpack.c.bf16 %v1134, %v1133
  %v1148 = vpack.c.bf16 %v1136, %v1135
  %v1149 = vpack.c.bf16 %v1138, %v1137
  %v1150 = vpack.c.bf16 %v1140, %v1139
  %v1151 = vpack.c.bf16 %v1142, %v1141
  %v1152 = vpack.c.bf16 %v1144, %v1143
  %1153 = vmatpush.bf16.xpose.msra.mxu0 %v1152
  %1154 = vmatpush.bf16.xpose.msra.mxu0 %v1151
  %1155 = vmatpush.bf16.xpose.msra.mxu0 %v1150
  %1156 = vmatpush.bf16.xpose.msra.mxu0 %v1149
  %1157 = vmatpush.bf16.xpose.msra.mxu0 %v1148
  %1158 = vmatpush.bf16.xpose.msra.mxu0 %v1147
  %1159 = vmatpush.bf16.xpose.msra.mxu0 %v1146
  %1160 = vmatpush.bf16.xpose.msra.mxu0 %v1145
  %1161 = vmatmul.bf16.gmra.mxu0 %v1145
  %v1162 = vpop.f32.mrf.mxu0
  %v1163 = vadd.f32 0.0, %v1162
  %v1164 = vpop.f32.mrf.mxu0
  %v1165 = vadd.f32 0.0, %v1164
  %1166 = vmatmul.bf16.gmra.mxu0 %v1146
  %v1167 = vpop.f32.mrf.mxu0
  %v1168 = vadd.f32 0.0, %v1167
  %v1169 = vpop.f32.mrf.mxu0
  %v1170 = vadd.f32 0.0, %v1169
  %1171 = vmatmul.bf16.gmra.mxu0 %v1147
  %v1172 = vpop.f32.mrf.mxu0
  %v1173 = vadd.f32 0.0, %v1172
  %v1174 = vpop.f32.mrf.mxu0
  %v1175 = vadd.f32 0.0, %v1174
  %1176 = vmatmul.bf16.gmra.mxu0 %v1148
  %v1177 = vpop.f32.mrf.mxu0
  %v1178 = vadd.f32 0.0, %v1177
  %v1179 = vpop.f32.mrf.mxu0
  %v1180 = vadd.f32 0.0, %v1179
  %1181 = vmatmul.bf16.gmra.mxu0 %v1149
  %v1182 = vpop.f32.mrf.mxu0
  %v1183 = vadd.f32 0.0, %v1182
  %v1184 = vpop.f32.mrf.mxu0
  %v1185 = vadd.f32 0.0, %v1184
  %1186 = vmatmul.bf16.gmra.mxu0 %v1150
  %v1187 = vpop.f32.mrf.mxu0
  %v1188 = vadd.f32 0.0, %v1187
  %v1189 = vpop.f32.mrf.mxu0
  %v1190 = vadd.f32 0.0, %v1189
  %1191 = vmatmul.bf16.gmra.mxu0 %v1151
  %v1192 = vpop.f32.mrf.mxu0
  %v1193 = vadd.f32 0.0, %v1192
  %v1194 = vpop.f32.mrf.mxu0
  %v1195 = vadd.f32 0.0, %v1194
  %1196 = vmatmul.bf16.gmra.mxu0 %v1152
  %v1197 = vpop.f32.mrf.mxu0
  %v1198 = vadd.f32 0.0, %v1197
  %v1199 = vpop.f32.mrf.mxu0
  %v1200 = vadd.f32 0.0, %v1199
  %1201 = vdwg.mxu0
  %v1202 = vxor.u32 %v1163, 2147483648
  %v1203 = vxor.u32 %v1165, 2147483648
  %v1204 = vxor.u32 %v1168, 2147483648
  %v1205 = vxor.u32 %v1170, 2147483648
  %v1206 = vxor.u32 %v1173, 2147483648
  %v1207 = vxor.u32 %v1175, 2147483648
  %v1208 = vxor.u32 %v1178, 2147483648
  %v1209 = vxor.u32 %v1180, 2147483648
  %v1210 = vxor.u32 %v1183, 2147483648
  %v1211 = vxor.u32 %v1185, 2147483648
  %v1212 = vxor.u32 %v1188, 2147483648
  %v1213 = vxor.u32 %v1190, 2147483648
  %v1214 = vxor.u32 %v1193, 2147483648
  %v1215 = vxor.u32 %v1195, 2147483648
  %v1216 = vxor.u32 %v1198, 2147483648
  %v1217 = vxor.u32 %v1200, 2147483648
  %v1218 = vmul.f32 %v1202, 1.442695
  %v1219 = vpow.pop %v1218
  %v1220 = vmul.f32 %v1203, 1.442695
  %v1221 = vpow.pop %v1220
  %v1222 = vmul.f32 %v1204, 1.442695
  %v1223 = vpow.pop %v1222
  %v1224 = vmul.f32 %v1205, 1.442695
  %v1225 = vpow.pop %v1224
  %v1226 = vmul.f32 %v1206, 1.442695
  %v1227 = vpow.pop %v1226
  %v1228 = vmul.f32 %v1207, 1.442695
  %v1229 = vpow.pop %v1228
  %v1230 = vmul.f32 %v1208, 1.442695
  %v1231 = vpow.pop %v1230
  %v1232 = vmul.f32 %v1209, 1.442695
  %v1233 = vpow.pop %v1232
  %v1234 = vmul.f32 %v1210, 1.442695
  %v1235 = vpow.pop %v1234
  %v1236 = vmul.f32 %v1211, 1.442695
  %v1237 = vpow.pop %v1236
  %v1238 = vmul.f32 %v1212, 1.442695
  %v1239 = vpow.pop %v1238
  %v1240 = vmul.f32 %v1213, 1.442695
  %v1241 = vpow.pop %v1240
  %v1242 = vmul.f32 %v1214, 1.442695
  %v1243 = vpow.pop %v1242
  %v1244 = vmul.f32 %v1215, 1.442695
  %v1245 = vpow.pop %v1244
  %v1246 = vmul.f32 %v1216, 1.442695
  %v1247 = vpow.pop %v1246
  %v1248 = vmul.f32 %v1217, 1.442695
  %v1249 = vpow.pop %v1248
  %v1250 = vadd.f32 %v1219, 1.0
  %v1251 = vadd.f32 %v1221, 1.0
  %v1252 = vadd.f32 %v1223, 1.0
  %v1253 = vadd.f32 %v1225, 1.0
  %v1254 = vadd.f32 %v1227, 1.0
  %v1255 = vadd.f32 %v1229, 1.0
  %v1256 = vadd.f32 %v1231, 1.0
  %v1257 = vadd.f32 %v1233, 1.0
  %v1258 = vadd.f32 %v1235, 1.0
  %v1259 = vadd.f32 %v1237, 1.0
  %v1260 = vadd.f32 %v1239, 1.0
  %v1261 = vadd.f32 %v1241, 1.0
  %v1262 = vadd.f32 %v1243, 1.0
  %v1263 = vadd.f32 %v1245, 1.0
  %v1264 = vadd.f32 %v1247, 1.0
  %v1265 = vadd.f32 %v1249, 1.0
  %v1266 = vrcp.pop %v1250
  %v1267 = vmul.f32 %v1250, %v1266
  %v1268 = vsub.f32 1.0, %v1267
  %v1269 = vmul.f32 %v1266, %v1268
  %v1270 = vadd.f32 %v1266, %v1269
  %vm1271 = vweird.f32 %v1250
  %vm1272 = vweird.f32 %v1266
  %vm1273 = vmor %vm1271, %vm1272
  %v1274 = vsel %vm1273, %v1266, %v1270
  %v1275 = vand.u32 2147483647, %v1250
  %vm1276 = vcmp.eq.f32.partialorder %v1275, 8.507059e+37
  %v1277 = vand.u32 %v1250, 2147483648
  %v1278 = vor.u32 1.1754944e-38, %v1277
  %v1279 = vsel %vm1276, %v1278, %v1274
  %v1280 = vmul.f32 1.0, %v1279
  %v1281 = vrcp.pop %v1251
  %v1282 = vmul.f32 %v1251, %v1281
  %v1283 = vsub.f32 1.0, %v1282
  %v1284 = vmul.f32 %v1281, %v1283
  %v1285 = vadd.f32 %v1281, %v1284
  %vm1286 = vweird.f32 %v1251
  %vm1287 = vweird.f32 %v1281
  %vm1288 = vmor %vm1286, %vm1287
  %v1289 = vsel %vm1288, %v1281, %v1285
  %v1290 = vand.u32 2147483647, %v1251
  %vm1291 = vcmp.eq.f32.partialorder %v1290, 8.507059e+37
  %v1292 = vand.u32 %v1251, 2147483648
  %v1293 = vor.u32 1.1754944e-38, %v1292
  %v1294 = vsel %vm1291, %v1293, %v1289
  %v1295 = vmul.f32 1.0, %v1294
  %v1296 = vrcp.pop %v1252
  %v1297 = vmul.f32 %v1252, %v1296
  %v1298 = vsub.f32 1.0, %v1297
  %v1299 = vmul.f32 %v1296, %v1298
  %v1300 = vadd.f32 %v1296, %v1299
  %vm1301 = vweird.f32 %v1252
  %vm1302 = vweird.f32 %v1296
  %vm1303 = vmor %vm1301, %vm1302
  %v1304 = vsel %vm1303, %v1296, %v1300
  %v1305 = vand.u32 2147483647, %v1252
  %vm1306 = vcmp.eq.f32.partialorder %v1305, 8.507059e+37
  %v1307 = vand.u32 %v1252, 2147483648
  %v1308 = vor.u32 1.1754944e-38, %v1307
  %v1309 = vsel %vm1306, %v1308, %v1304
  %v1310 = vmul.f32 1.0, %v1309
  %v1311 = vrcp.pop %v1253
  %v1312 = vmul.f32 %v1253, %v1311
  %v1313 = vsub.f32 1.0, %v1312
  %v1314 = vmul.f32 %v1311, %v1313
  %v1315 = vadd.f32 %v1311, %v1314
  %vm1316 = vweird.f32 %v1253
  %vm1317 = vweird.f32 %v1311
  %vm1318 = vmor %vm1316, %vm1317
  %v1319 = vsel %vm1318, %v1311, %v1315
  %v1320 = vand.u32 2147483647, %v1253
  %vm1321 = vcmp.eq.f32.partialorder %v1320, 8.507059e+37
  %v1322 = vand.u32 %v1253, 2147483648
  %v1323 = vor.u32 1.1754944e-38, %v1322
  %v1324 = vsel %vm1321, %v1323, %v1319
  %v1325 = vmul.f32 1.0, %v1324
  %v1326 = vrcp.pop %v1254
  %v1327 = vmul.f32 %v1254, %v1326
  %v1328 = vsub.f32 1.0, %v1327
  %v1329 = vmul.f32 %v1326, %v1328
  %v1330 = vadd.f32 %v1326, %v1329
  %vm1331 = vweird.f32 %v1254
  %vm1332 = vweird.f32 %v1326
  %vm1333 = vmor %vm1331, %vm1332
  %v1334 = vsel %vm1333, %v1326, %v1330
  %v1335 = vand.u32 2147483647, %v1254
  %vm1336 = vcmp.eq.f32.partialorder %v1335, 8.507059e+37
  %v1337 = vand.u32 %v1254, 2147483648
  %v1338 = vor.u32 1.1754944e-38, %v1337
  %v1339 = vsel %vm1336, %v1338, %v1334
  %v1340 = vmul.f32 1.0, %v1339
  %v1341 = vrcp.pop %v1255
  %v1342 = vmul.f32 %v1255, %v1341
  %v1343 = vsub.f32 1.0, %v1342
  %v1344 = vmul.f32 %v1341, %v1343
  %v1345 = vadd.f32 %v1341, %v1344
  %vm1346 = vweird.f32 %v1255
  %vm1347 = vweird.f32 %v1341
  %vm1348 = vmor %vm1346, %vm1347
  %v1349 = vsel %vm1348, %v1341, %v1345
  %v1350 = vand.u32 2147483647, %v1255
  %vm1351 = vcmp.eq.f32.partialorder %v1350, 8.507059e+37
  %v1352 = vand.u32 %v1255, 2147483648
  %v1353 = vor.u32 1.1754944e-38, %v1352
  %v1354 = vsel %vm1351, %v1353, %v1349
  %v1355 = vmul.f32 1.0, %v1354
  %v1356 = vrcp.pop %v1256
  %v1357 = vmul.f32 %v1256, %v1356
  %v1358 = vsub.f32 1.0, %v1357
  %v1359 = vmul.f32 %v1356, %v1358
  %v1360 = vadd.f32 %v1356, %v1359
  %vm1361 = vweird.f32 %v1256
  %vm1362 = vweird.f32 %v1356
  %vm1363 = vmor %vm1361, %vm1362
  %v1364 = vsel %vm1363, %v1356, %v1360
  %v1365 = vand.u32 2147483647, %v1256
  %vm1366 = vcmp.eq.f32.partialorder %v1365, 8.507059e+37
  %v1367 = vand.u32 %v1256, 2147483648
  %v1368 = vor.u32 1.1754944e-38, %v1367
  %v1369 = vsel %vm1366, %v1368, %v1364
  %v1370 = vmul.f32 1.0, %v1369
  %v1371 = vrcp.pop %v1257
  %v1372 = vmul.f32 %v1257, %v1371
  %v1373 = vsub.f32 1.0, %v1372
  %v1374 = vmul.f32 %v1371, %v1373
  %v1375 = vadd.f32 %v1371, %v1374
  %vm1376 = vweird.f32 %v1257
  %vm1377 = vweird.f32 %v1371
  %vm1378 = vmor %vm1376, %vm1377
  %v1379 = vsel %vm1378, %v1371, %v1375
  %v1380 = vand.u32 2147483647, %v1257
  %vm1381 = vcmp.eq.f32.partialorder %v1380, 8.507059e+37
  %v1382 = vand.u32 %v1257, 2147483648
  %v1383 = vor.u32 1.1754944e-38, %v1382
  %v1384 = vsel %vm1381, %v1383, %v1379
  %v1385 = vmul.f32 1.0, %v1384
  %v1386 = vrcp.pop %v1258
  %v1387 = vmul.f32 %v1258, %v1386
  %v1388 = vsub.f32 1.0, %v1387
  %v1389 = vmul.f32 %v1386, %v1388
  %v1390 = vadd.f32 %v1386, %v1389
  %vm1391 = vweird.f32 %v1258
  %vm1392 = vweird.f32 %v1386
  %vm1393 = vmor %vm1391, %vm1392
  %v1394 = vsel %vm1393, %v1386, %v1390
  %v1395 = vand.u32 2147483647, %v1258
  %vm1396 = vcmp.eq.f32.partialorder %v1395, 8.507059e+37
  %v1397 = vand.u32 %v1258, 2147483648
  %v1398 = vor.u32 1.1754944e-38, %v1397
  %v1399 = vsel %vm1396, %v1398, %v1394
  %v1400 = vmul.f32 1.0, %v1399
  %v1401 = vrcp.pop %v1259
  %v1402 = vmul.f32 %v1259, %v1401
  %v1403 = vsub.f32 1.0, %v1402
  %v1404 = vmul.f32 %v1401, %v1403
  %v1405 = vadd.f32 %v1401, %v1404
  %vm1406 = vweird.f32 %v1259
  %vm1407 = vweird.f32 %v1401
  %vm1408 = vmor %vm1406, %vm1407
  %v1409 = vsel %vm1408, %v1401, %v1405
  %v1410 = vand.u32 2147483647, %v1259
  %vm1411 = vcmp.eq.f32.partialorder %v1410, 8.507059e+37
  %v1412 = vand.u32 %v1259, 2147483648
  %v1413 = vor.u32 1.1754944e-38, %v1412
  %v1414 = vsel %vm1411, %v1413, %v1409
  %v1415 = vmul.f32 1.0, %v1414
  %v1416 = vrcp.pop %v1260
  %v1417 = vmul.f32 %v1260, %v1416
  %v1418 = vsub.f32 1.0, %v1417
  %v1419 = vmul.f32 %v1416, %v1418
  %v1420 = vadd.f32 %v1416, %v1419
  %vm1421 = vweird.f32 %v1260
  %vm1422 = vweird.f32 %v1416
  %vm1423 = vmor %vm1421, %vm1422
  %v1424 = vsel %vm1423, %v1416, %v1420
  %v1425 = vand.u32 2147483647, %v1260
  %vm1426 = vcmp.eq.f32.partialorder %v1425, 8.507059e+37
  %v1427 = vand.u32 %v1260, 2147483648
  %v1428 = vor.u32 1.1754944e-38, %v1427
  %v1429 = vsel %vm1426, %v1428, %v1424
  %v1430 = vmul.f32 1.0, %v1429
  %v1431 = vrcp.pop %v1261
  %v1432 = vmul.f32 %v1261, %v1431
  %v1433 = vsub.f32 1.0, %v1432
  %v1434 = vmul.f32 %v1431, %v1433
  %v1435 = vadd.f32 %v1431, %v1434
  %vm1436 = vweird.f32 %v1261
  %vm1437 = vweird.f32 %v1431
  %vm1438 = vmor %vm1436, %vm1437
  %v1439 = vsel %vm1438, %v1431, %v1435
  %v1440 = vand.u32 2147483647, %v1261
  %vm1441 = vcmp.eq.f32.partialorder %v1440, 8.507059e+37
  %v1442 = vand.u32 %v1261, 2147483648
  %v1443 = vor.u32 1.1754944e-38, %v1442
  %v1444 = vsel %vm1441, %v1443, %v1439
  %v1445 = vmul.f32 1.0, %v1444
  %v1446 = vrcp.pop %v1262
  %v1447 = vmul.f32 %v1262, %v1446
  %v1448 = vsub.f32 1.0, %v1447
  %v1449 = vmul.f32 %v1446, %v1448
  %v1450 = vadd.f32 %v1446, %v1449
  %vm1451 = vweird.f32 %v1262
  %vm1452 = vweird.f32 %v1446
  %vm1453 = vmor %vm1451, %vm1452
  %v1454 = vsel %vm1453, %v1446, %v1450
  %v1455 = vand.u32 2147483647, %v1262
  %vm1456 = vcmp.eq.f32.partialorder %v1455, 8.507059e+37
  %v1457 = vand.u32 %v1262, 2147483648
  %v1458 = vor.u32 1.1754944e-38, %v1457
  %v1459 = vsel %vm1456, %v1458, %v1454
  %v1460 = vmul.f32 1.0, %v1459
  %v1461 = vrcp.pop %v1263
  %v1462 = vmul.f32 %v1263, %v1461
  %v1463 = vsub.f32 1.0, %v1462
  %v1464 = vmul.f32 %v1461, %v1463
  %v1465 = vadd.f32 %v1461, %v1464
  %vm1466 = vweird.f32 %v1263
  %vm1467 = vweird.f32 %v1461
  %vm1468 = vmor %vm1466, %vm1467
  %v1469 = vsel %vm1468, %v1461, %v1465
  %v1470 = vand.u32 2147483647, %v1263
  %vm1471 = vcmp.eq.f32.partialorder %v1470, 8.507059e+37
  %v1472 = vand.u32 %v1263, 2147483648
  %v1473 = vor.u32 1.1754944e-38, %v1472
  %v1474 = vsel %vm1471, %v1473, %v1469
  %v1475 = vmul.f32 1.0, %v1474
  %v1476 = vrcp.pop %v1264
  %v1477 = vmul.f32 %v1264, %v1476
  %v1478 = vsub.f32 1.0, %v1477
  %v1479 = vmul.f32 %v1476, %v1478
  %v1480 = vadd.f32 %v1476, %v1479
  %vm1481 = vweird.f32 %v1264
  %vm1482 = vweird.f32 %v1476
  %vm1483 = vmor %vm1481, %vm1482
  %v1484 = vsel %vm1483, %v1476, %v1480
  %v1485 = vand.u32 2147483647, %v1264
  %vm1486 = vcmp.eq.f32.partialorder %v1485, 8.507059e+37
  %v1487 = vand.u32 %v1264, 2147483648
  %v1488 = vor.u32 1.1754944e-38, %v1487
  %v1489 = vsel %vm1486, %v1488, %v1484
  %v1490 = vmul.f32 1.0, %v1489
  %v1491 = vrcp.pop %v1265
  %v1492 = vmul.f32 %v1265, %v1491
  %v1493 = vsub.f32 1.0, %v1492
  %v1494 = vmul.f32 %v1491, %v1493
  %v1495 = vadd.f32 %v1491, %v1494
  %vm1496 = vweird.f32 %v1265
  %vm1497 = vweird.f32 %v1491
  %vm1498 = vmor %vm1496, %vm1497
  %v1499 = vsel %vm1498, %v1491, %v1495
  %v1500 = vand.u32 2147483647, %v1265
  %vm1501 = vcmp.eq.f32.partialorder %v1500, 8.507059e+37
  %v1502 = vand.u32 %v1265, 2147483648
  %v1503 = vor.u32 1.1754944e-38, %v1502
  %v1504 = vsel %vm1501, %v1503, %v1499
  %v1505 = vmul.f32 1.0, %v1504
  %1506 = vst [vmem:[%s13] sm:$0xff] %v1280
  %1507 = vst [vmem:[%s13 + $0x8] sm:$0xff] %v1295
  %1508 = vst [vmem:[%s13 + $0x10] sm:$0xff] %v1310
  %1509 = vst [vmem:[%s13 + $0x18] sm:$0xff] %v1325
  %1510 = vst [vmem:[%s13 + $0x20] sm:$0xff] %v1340
  %1511 = vst [vmem:[%s13 + $0x28] sm:$0xff] %v1355
  %1512 = vst [vmem:[%s13 + $0x30] sm:$0xff] %v1370
  %1513 = vst [vmem:[%s13 + $0x38] sm:$0xff] %v1385
  %1514 = vst [vmem:[%s13 + $0x40] sm:$0xff] %v1400
  %1515 = vst [vmem:[%s13 + $0x48] sm:$0xff] %v1415
  %1516 = vst [vmem:[%s13 + $0x50] sm:$0xff] %v1430
  %1517 = vst [vmem:[%s13 + $0x58] sm:$0xff] %v1445
  %1518 = vst [vmem:[%s13 + $0x60] sm:$0xff] %v1460
  %1519 = vst [vmem:[%s13 + $0x68] sm:$0xff] %v1475
  %1520 = vst [vmem:[%s13 + $0x70] sm:$0xff] %v1490
  %1521 = vst [vmem:[%s13 + $0x78] sm:$0xff] %v1505
  // Predicated region
  $region50: #{gae_forward.1} parent=0 // pred_check
    _
  $region51: #{gae_forward.1} parent=0 // pred_check_branch
    %1523 = sbr.rel (0) target = $region53
  $region52: #{gae_forward.1} parent=0 // pred_region
    _
  $region53: #{gae_forward.1} parent=0 // pred_fallthru
    _
  // Predicated region
  $region54: #{gae_forward.1} parent=0 // pred_check
    _
  $region55: #{gae_forward.1} parent=0 // pred_check_branch
    %1525 = sbr.rel (0) target = $region57
  $region56: #{gae_forward.1} parent=0 // pred_region
    _
  $region57: #{gae_forward.1} parent=0 // pred_fallthru
    _
  // Predicated region
  $region58: #{gae_forward.1} parent=0 // pred_check
    _
  $region59: #{gae_forward.1} parent=0 // pred_check_branch
    %1527 = sbr.rel (0) target = $region61
  $region60: #{gae_forward.1} parent=0 // pred_region
    _
  $region61: #{gae_forward.1} parent=0 // pred_fallthru
    _
  // Predicated region
  $region62: #{gae_forward.1} parent=0 // pred_check
    _
  $region63: #{gae_forward.1} parent=0 // pred_check_branch
    %1529 = sbr.rel (0) target = $region65
  $region64: #{gae_forward.1} parent=0 // pred_region
    _
  $region65: #{gae_forward.1} parent=0 // pred_fallthru
    _

</llo_original>
